<compile_context>
chip_gen: v6e
topology: v6e:2x2x1
jax: 0.10.0
libtpu: 0.0.40
codegen_flags: <defaults>
</compile_context>

<pallas_src>
import functools

import jax
import jax.numpy as jnp
from jax.experimental import pallas as pl
from jax.experimental.pallas import tpu as pltpu

N_BINS = 10


# ------------------------------ Pallas kernel -------------------------------

def _hist_kernel(i_ref, k_ref, c_ref, w_ref, o_ref, eik_ref, a_ref,
                 *, H, W, TH, n_bins):
    """One (batch image, row-tile) step of the fused Hist forward.

    i_ref   : (1, 1, TH+4, W+4) f32  zero-padded input row tile (halo = 2)
    k_ref   : (9,)      f32 SMEM  stage-1 kernel K (row-major 3x3)
    c_ref   : (n_bins,) f32 SMEM  exp(-b_j) per bin
    w_ref   : (9,)      f32 SMEM  stage-2 kernel W (row-major 3x3)
    o_ref   : (1, n_bins, TH, W) f32 output block
    eik_ref : (TH+2, W+2) f32 VMEM scratch — masked exp(IK), shared by all bins
    a_ref   : (TH+2, W+2) f32 VMEM scratch — per-bin activation (reused)
    """
    r0 = pl.program_id(1) * TH   # first output row of this tile (global index)

    # ---- stage 1: IK = conv3x3(I, K, padding=1) on a (TH+2, W+2) halo window.
    # 9 shifted multiply-accumulates on the VPU (K taps are SMEM scalars).
    ik = k_ref[0] * i_ref[0, 0, 0:TH + 2, 0:W + 2]
    for t in range(1, 9):
        dy, dx = t // 3, t % 3
        ik = ik + k_ref[t] * i_ref[0, 0, dy:dy + TH + 2, dx:dx + W + 2]

    # One transcendental per element for ALL bins:
    #   sigmoid(b_j - IK) = 1 / (1 + exp(IK) * exp(-b_j))
    # Stage-2 uses padding='same', so A_j must be exactly zero outside the
    # original HxW image; folding that mask into eIK (eIK = 0 there) makes
    # A_j = t * s * s vanish exactly without a per-bin mask multiply.
    rows = r0 - 1 + jax.lax.broadcasted_iota(jnp.int32, (TH + 2, W + 2), 0)
    cols = jax.lax.broadcasted_iota(jnp.int32, (TH + 2, W + 2), 1)
    valid = (rows >= 0) & (rows < H) & (cols >= 1) & (cols <= W)
    eik_ref[...] = jnp.where(valid, jnp.exp(ik), 0.0)

    # ---- per bin j:  A_j = sigmoid'(b_j - IK)   (= t / (1 + t)^2, t = eIK*c_j)
    #                  X_j = conv3x3(A_j, W, padding=1)   (depthwise stage 2)
    for j in range(n_bins):
        t_ = eik_ref[...] * c_ref[j]                 # exp(IK - b_j)
        s = pl.reciprocal(1.0 + t_, approx=True)     # sigmoid(b_j - IK)  (EUP)
        a_ref[...] = t_ * (s * s)                    # sigmoid' ; 0 in the halo

        acc = w_ref[0] * a_ref[0:TH, 0:W]
        for tap in range(1, 9):
            dy, dx = tap // 3, tap % 3
            acc = acc + w_ref[tap] * a_ref[dy:dy + TH, dx:dx + W]
        o_ref[0, j, :, :] = acc


# ------------------------------ host wrapper --------------------------------

def _choose_row_tile(H, W, n_bins, out_block_budget=4 * 1024 * 1024):
    """Largest row tile whose f32 output block stays under ~4 MiB."""
    th = out_block_budget // (n_bins * max(W, 1) * 4)
    if th >= H:
        return H                      # whole image fits: single row tile
    th = max(8, (th // 8) * 8)        # keep sublane (8) alignment when tiling
    return min(th, H)


def hist_forward(b, K, Wk, I):
    """Pallas Hist forward.  I: (N, 1, H, W) NCHW -> (N, nBins, H, W)."""
    n_bins = int(b.shape[0])
    N, C, H, W = I.shape
    assert C == 1, "Hist uses a (1,1,3,3) kernel -> single-channel input"

    TH = _choose_row_tile(H, W, n_bins)
    nH = -(-H // TH)                   # ceil(H / TH)
    pad_h = nH * TH - H

    # Zero-pad by 2 (stage-1 pad + stage-2 pad) and pre-slice overlapping row
    # tiles with their 4-row halo; only 4 duplicated rows per tile in HBM.
    x = I[:, 0].astype(jnp.float32)                      # (N, H, W)
    xpad = jnp.pad(x, ((0, 0), (2, 2 + pad_h), (2, 2)))  # (N, nH*TH+4, W+4)
    tiles = jnp.stack(
        [xpad[:, r * TH:r * TH + TH + 4, :] for r in range(nH)], axis=1)
    # tiles: (N, nH, TH+4, W+4)

    kflat = K.reshape(9).astype(jnp.float32)
    wflat = Wk.reshape(9).astype(jnp.float32)
    cflat = jnp.exp(-b.astype(jnp.float32))              # exp(-b_j), SMEM scalars

    kernel = functools.partial(_hist_kernel, H=H, W=W, TH=TH, n_bins=n_bins)
    out = pl.pallas_call(
        kernel,
        out_shape=jax.ShapeDtypeStruct((N, n_bins, nH * TH, W), jnp.float32),
        grid=(N, nH),
        in_specs=[
            pl.BlockSpec((1, 1, TH + 4, W + 4), lambda n, r: (n, r, 0, 0)),
            pl.BlockSpec(memory_space=pltpu.MemorySpace.SMEM),   # K taps
            pl.BlockSpec(memory_space=pltpu.MemorySpace.SMEM),   # exp(-b)
            pl.BlockSpec(memory_space=pltpu.MemorySpace.SMEM),   # W taps
        ],
        out_specs=pl.BlockSpec((1, n_bins, TH, W), lambda n, r: (n, 0, r, 0)),
        scratch_shapes=[
            pltpu.VMEM((TH + 2, W + 2), jnp.float32),  # masked exp(IK)
            pltpu.VMEM((TH + 2, W + 2), jnp.float32),  # per-bin activation
        ],
        compiler_params=pltpu.CompilerParams(
            dimension_semantics=("parallel", "parallel"),
            vmem_limit_bytes=32 * 1024 * 1024,
        ),
    )(tiles, kflat, cflat, wflat)

    if pad_h:
        out = out[:, :, :H, :]
    return out


# --------------------------- pure-JAX reference -----------------------------

def hist_reference(b, K, Wk, I):
    """Direct transcription of the PyTorch Hist.forward (eval semantics)."""
    n_bins = b.shape[0]
    IK = jax.lax.conv_general_dilated(
        I.astype(jnp.float32), K.astype(jnp.float32), (1, 1), ((1, 1), (1, 1)),
        dimension_numbers=("NCHW", "OIHW", "NCHW"))
    s = jax.nn.sigmoid(b.reshape(1, n_bins, 1, 1) - IK)
    A = s * (1.0 - s)
    V = jnp.concatenate([Wk.astype(jnp.float32)] * n_bins, axis=0)  # (nBins,1,3,3)
    return jax.lax.conv_general_dilated(
        A, V, (1, 1), ((1, 1), (1, 1)),
        dimension_numbers=("NCHW", "OIHW", "NCHW"),
        feature_group_count=n_bins)


# ----------------------------------- main ------------------------------------

if __name__ == "__main__":
    key = jax.random.PRNGKey(0)
    kb, kk, kw, kx = jax.random.split(key, 4)

    b = jax.random.normal(kb, (N_BINS,), jnp.float32)          # nn.Parameter b
    K = jax.random.normal(kk, (1, 1, 3, 3), jnp.float32)       # nn.Parameter K
    Wk = jax.random.normal(kw, (1, 1, 3, 3), jnp.float32)      # nn.Parameter W
    x = jax.random.normal(kx, (2, 1, 16, 16), jnp.float32)     # NCHW input

    fwd = jax.jit(hist_forward)
    out = jax.block_until_ready(fwd(b, K, Wk, x))

    assert out.shape == (2, N_BINS, 16, 16), out.shape
    assert bool(jnp.all(jnp.isfinite(out)))

    ref = jax.block_until_ready(hist_reference(b, K, Wk, x))
    max_err = float(jnp.max(jnp.abs(out - ref)))
    # approx=True reciprocal (EUP) gives ~1e-4 relative error on the sigmoid;
    # after the 9-tap stage-2 conv that is well under 2e-2 absolute.
    assert max_err < 2e-2, max_err

    print("KERNEL_OK")
</pallas_src>

<mosaic_0001>
module attributes {stable_mosaic.version = 11 : i64} {
  func.func @_hist_kernel(%arg0: i32, %arg1: i32, %arg2: memref<1x1x20x20xf32, #tpu.memory_space<vmem>>, %arg3: memref<9xf32, #tpu.memory_space<smem>>, %arg4: memref<10xf32, #tpu.memory_space<smem>>, %arg5: memref<9xf32, #tpu.memory_space<smem>>, %arg6: memref<1x10x16x16xf32, #tpu.memory_space<vmem>>, %arg7: memref<18x18xf32, #tpu.memory_space<vmem>>, %arg8: memref<18x18xf32, #tpu.memory_space<vmem>>) attributes {dimension_semantics = [#tpu.dimension_semantics<parallel>, #tpu.dimension_semantics<parallel>], iteration_bounds = array<i64: 2, 1>, scalar_prefetch = 0 : i64, scratch_operands = 2 : i64, tpu.core_type = #tpu.core_type<tc>, window_params = [{transform_indices = @transform_0, window_bounds = array<i64: 1, 1, 20, 20>}, {transform_indices = @transform_1, window_bounds = array<i64: 9>}, {transform_indices = @transform_2, window_bounds = array<i64: 10>}, {transform_indices = @transform_3, window_bounds = array<i64: 9>}, {transform_indices = @transform_4, window_bounds = array<i64: 1, 10, 16, 16>}]} {
    %c16_i32 = arith.constant 16 : i32
    %0 = arith.muli %arg1, %c16_i32 : i32
    %c0 = arith.constant 0 : index
    %1 = memref.load %arg3[%c0] : memref<9xf32, #tpu.memory_space<smem>>
    %c0_0 = arith.constant 0 : index
    %c0_1 = arith.constant 0 : index
    %c0_2 = arith.constant 0 : index
    %c0_3 = arith.constant 0 : index
    %2 = vector.load %arg2[%c0_0, %c0_1, %c0_2, %c0_3] : memref<1x1x20x20xf32, #tpu.memory_space<vmem>>, vector<1x1x18x18xf32>
    %3 = vector.shape_cast %2 : vector<1x1x18x18xf32> to vector<18x18xf32>
    %4 = vector.broadcast %1 : f32 to vector<18x18xf32>
    %5 = arith.mulf %4, %3 : vector<18x18xf32>
    %c1 = arith.constant 1 : index
    %6 = memref.load %arg3[%c1] : memref<9xf32, #tpu.memory_space<smem>>
    %c0_4 = arith.constant 0 : index
    %c0_5 = arith.constant 0 : index
    %c0_6 = arith.constant 0 : index
    %c1_7 = arith.constant 1 : index
    %7 = vector.load %arg2[%c0_4, %c0_5, %c0_6, %c1_7] : memref<1x1x20x20xf32, #tpu.memory_space<vmem>>, vector<1x1x18x18xf32>
    %8 = vector.shape_cast %7 : vector<1x1x18x18xf32> to vector<18x18xf32>
    %9 = vector.broadcast %6 : f32 to vector<18x18xf32>
    %10 = arith.mulf %9, %8 : vector<18x18xf32>
    %11 = arith.addf %5, %10 : vector<18x18xf32>
    %c2 = arith.constant 2 : index
    %12 = memref.load %arg3[%c2] : memref<9xf32, #tpu.memory_space<smem>>
    %c0_8 = arith.constant 0 : index
    %c0_9 = arith.constant 0 : index
    %c0_10 = arith.constant 0 : index
    %c2_11 = arith.constant 2 : index
    %13 = vector.load %arg2[%c0_8, %c0_9, %c0_10, %c2_11] : memref<1x1x20x20xf32, #tpu.memory_space<vmem>>, vector<1x1x18x18xf32>
    %14 = vector.shape_cast %13 : vector<1x1x18x18xf32> to vector<18x18xf32>
    %15 = vector.broadcast %12 : f32 to vector<18x18xf32>
    %16 = arith.mulf %15, %14 : vector<18x18xf32>
    %17 = arith.addf %11, %16 : vector<18x18xf32>
    %c3 = arith.constant 3 : index
    %18 = memref.load %arg3[%c3] : memref<9xf32, #tpu.memory_space<smem>>
    %c0_12 = arith.constant 0 : index
    %c0_13 = arith.constant 0 : index
    %c1_14 = arith.constant 1 : index
    %c0_15 = arith.constant 0 : index
    %19 = vector.load %arg2[%c0_12, %c0_13, %c1_14, %c0_15] : memref<1x1x20x20xf32, #tpu.memory_space<vmem>>, vector<1x1x18x18xf32>
    %20 = vector.shape_cast %19 : vector<1x1x18x18xf32> to vector<18x18xf32>
    %21 = vector.broadcast %18 : f32 to vector<18x18xf32>
    %22 = arith.mulf %21, %20 : vector<18x18xf32>
    %23 = arith.addf %17, %22 : vector<18x18xf32>
    %c4 = arith.constant 4 : index
    %24 = memref.load %arg3[%c4] : memref<9xf32, #tpu.memory_space<smem>>
    %c0_16 = arith.constant 0 : index
    %c0_17 = arith.constant 0 : index
    %c1_18 = arith.constant 1 : index
    %c1_19 = arith.constant 1 : index
    %25 = vector.load %arg2[%c0_16, %c0_17, %c1_18, %c1_19] : memref<1x1x20x20xf32, #tpu.memory_space<vmem>>, vector<1x1x18x18xf32>
    %26 = vector.shape_cast %25 : vector<1x1x18x18xf32> to vector<18x18xf32>
    %27 = vector.broadcast %24 : f32 to vector<18x18xf32>
    %28 = arith.mulf %27, %26 : vector<18x18xf32>
    %29 = arith.addf %23, %28 : vector<18x18xf32>
    %c5 = arith.constant 5 : index
    %30 = memref.load %arg3[%c5] : memref<9xf32, #tpu.memory_space<smem>>
    %c0_20 = arith.constant 0 : index
    %c0_21 = arith.constant 0 : index
    %c1_22 = arith.constant 1 : index
    %c2_23 = arith.constant 2 : index
    %31 = vector.load %arg2[%c0_20, %c0_21, %c1_22, %c2_23] : memref<1x1x20x20xf32, #tpu.memory_space<vmem>>, vector<1x1x18x18xf32>
    %32 = vector.shape_cast %31 : vector<1x1x18x18xf32> to vector<18x18xf32>
    %33 = vector.broadcast %30 : f32 to vector<18x18xf32>
    %34 = arith.mulf %33, %32 : vector<18x18xf32>
    %35 = arith.addf %29, %34 : vector<18x18xf32>
    %c6 = arith.constant 6 : index
    %36 = memref.load %arg3[%c6] : memref<9xf32, #tpu.memory_space<smem>>
    %c0_24 = arith.constant 0 : index
    %c0_25 = arith.constant 0 : index
    %c2_26 = arith.constant 2 : index
    %c0_27 = arith.constant 0 : index
    %37 = vector.load %arg2[%c0_24, %c0_25, %c2_26, %c0_27] : memref<1x1x20x20xf32, #tpu.memory_space<vmem>>, vector<1x1x18x18xf32>
    %38 = vector.shape_cast %37 : vector<1x1x18x18xf32> to vector<18x18xf32>
    %39 = vector.broadcast %36 : f32 to vector<18x18xf32>
    %40 = arith.mulf %39, %38 : vector<18x18xf32>
    %41 = arith.addf %35, %40 : vector<18x18xf32>
    %c7 = arith.constant 7 : index
    %42 = memref.load %arg3[%c7] : memref<9xf32, #tpu.memory_space<smem>>
    %c0_28 = arith.constant 0 : index
    %c0_29 = arith.constant 0 : index
    %c2_30 = arith.constant 2 : index
    %c1_31 = arith.constant 1 : index
    %43 = vector.load %arg2[%c0_28, %c0_29, %c2_30, %c1_31] : memref<1x1x20x20xf32, #tpu.memory_space<vmem>>, vector<1x1x18x18xf32>
    %44 = vector.shape_cast %43 : vector<1x1x18x18xf32> to vector<18x18xf32>
    %45 = vector.broadcast %42 : f32 to vector<18x18xf32>
    %46 = arith.mulf %45, %44 : vector<18x18xf32>
    %47 = arith.addf %41, %46 : vector<18x18xf32>
    %c8 = arith.constant 8 : index
    %48 = memref.load %arg3[%c8] : memref<9xf32, #tpu.memory_space<smem>>
    %c0_32 = arith.constant 0 : index
    %c0_33 = arith.constant 0 : index
    %c2_34 = arith.constant 2 : index
    %c2_35 = arith.constant 2 : index
    %49 = vector.load %arg2[%c0_32, %c0_33, %c2_34, %c2_35] : memref<1x1x20x20xf32, #tpu.memory_space<vmem>>, vector<1x1x18x18xf32>
    %50 = vector.shape_cast %49 : vector<1x1x18x18xf32> to vector<18x18xf32>
    %51 = vector.broadcast %48 : f32 to vector<18x18xf32>
    %52 = arith.mulf %51, %50 : vector<18x18xf32>
    %53 = arith.addf %47, %52 : vector<18x18xf32>
    %c1_i32 = arith.constant 1 : i32
    %54 = arith.subi %0, %c1_i32 : i32
    %55 = tpu.iota {dimensions = array<i32: 0>} : vector<18x18xi32>
    %56 = vector.broadcast %54 : i32 to vector<18x18xi32>
    %57 = arith.addi %56, %55 : vector<18x18xi32>
    %58 = tpu.iota {dimensions = array<i32: 1>} : vector<18x18xi32>
    %c0_i32 = arith.constant 0 : i32
    %59 = vector.broadcast %c0_i32 : i32 to vector<18x18xi32>
    %60 = arith.cmpi sge, %57, %59 : vector<18x18xi32>
    %c16_i32_36 = arith.constant 16 : i32
    %61 = vector.broadcast %c16_i32_36 : i32 to vector<18x18xi32>
    %62 = arith.cmpi slt, %57, %61 : vector<18x18xi32>
    %63 = arith.andi %60, %62 : vector<18x18xi1>
    %c1_i32_37 = arith.constant 1 : i32
    %64 = vector.broadcast %c1_i32_37 : i32 to vector<18x18xi32>
    %65 = arith.cmpi sge, %58, %64 : vector<18x18xi32>
    %66 = arith.andi %63, %65 : vector<18x18xi1>
    %c16_i32_38 = arith.constant 16 : i32
    %67 = vector.broadcast %c16_i32_38 : i32 to vector<18x18xi32>
    %68 = arith.cmpi sle, %58, %67 : vector<18x18xi32>
    %69 = arith.andi %66, %68 : vector<18x18xi1>
    %70 = math.exp %53 : vector<18x18xf32>
    %cst = arith.constant 0.000000e+00 : f32
    %71 = vector.broadcast %cst : f32 to vector<18x18xf32>
    %72 = arith.select %69, %70, %71 : vector<18x18xi1>, vector<18x18xf32>
    %c0_39 = arith.constant 0 : index
    %c0_40 = arith.constant 0 : index
    %73 = vector.load %arg7[%c0_39, %c0_40] : memref<18x18xf32, #tpu.memory_space<vmem>>, vector<18x18xf32>
    tpu.vector_store %arg7[%c0_39, %c0_40], %72 {strides = array<i32>} : memref<18x18xf32, #tpu.memory_space<vmem>>, vector<18x18xf32>,
    %c0_41 = arith.constant 0 : index
    %c0_42 = arith.constant 0 : index
    %74 = vector.load %arg7[%c0_41, %c0_42] : memref<18x18xf32, #tpu.memory_space<vmem>>, vector<18x18xf32>
    %c0_43 = arith.constant 0 : index
    %75 = memref.load %arg4[%c0_43] : memref<10xf32, #tpu.memory_space<smem>>
    %76 = vector.broadcast %75 : f32 to vector<18x18xf32>
    %77 = arith.mulf %74, %76 : vector<18x18xf32>
    %cst_44 = arith.constant 1.000000e+00 : f32
    %78 = vector.broadcast %cst_44 : f32 to vector<18x18xf32>
    %79 = arith.addf %78, %77 : vector<18x18xf32>
    %80 = tpu.reciprocal %79 {approx = true} : vector<18x18xf32> -> vector<18x18xf32>
    %81 = arith.mulf %80, %80 : vector<18x18xf32>
    %82 = arith.mulf %77, %81 : vector<18x18xf32>
    %c0_45 = arith.constant 0 : index
    %c0_46 = arith.constant 0 : index
    %83 = vector.load %arg8[%c0_45, %c0_46] : memref<18x18xf32, #tpu.memory_space<vmem>>, vector<18x18xf32>
    tpu.vector_store %arg8[%c0_45, %c0_46], %82 {strides = array<i32>} : memref<18x18xf32, #tpu.memory_space<vmem>>, vector<18x18xf32>,
    %c0_47 = arith.constant 0 : index
    %84 = memref.load %arg5[%c0_47] : memref<9xf32, #tpu.memory_space<smem>>
    %c0_48 = arith.constant 0 : index
    %c0_49 = arith.constant 0 : index
    %85 = vector.load %arg8[%c0_48, %c0_49] : memref<18x18xf32, #tpu.memory_space<vmem>>, vector<16x16xf32>
    %86 = vector.broadcast %84 : f32 to vector<16x16xf32>
    %87 = arith.mulf %86, %85 : vector<16x16xf32>
    %c1_50 = arith.constant 1 : index
    %88 = memref.load %arg5[%c1_50] : memref<9xf32, #tpu.memory_space<smem>>
    %c0_51 = arith.constant 0 : index
    %c1_52 = arith.constant 1 : index
    %89 = vector.load %arg8[%c0_51, %c1_52] : memref<18x18xf32, #tpu.memory_space<vmem>>, vector<16x16xf32>
    %90 = vector.broadcast %88 : f32 to vector<16x16xf32>
    %91 = arith.mulf %90, %89 : vector<16x16xf32>
    %92 = arith.addf %87, %91 : vector<16x16xf32>
    %c2_53 = arith.constant 2 : index
    %93 = memref.load %arg5[%c2_53] : memref<9xf32, #tpu.memory_space<smem>>
    %c0_54 = arith.constant 0 : index
    %c2_55 = arith.constant 2 : index
    %94 = vector.load %arg8[%c0_54, %c2_55] : memref<18x18xf32, #tpu.memory_space<vmem>>, vector<16x16xf32>
    %95 = vector.broadcast %93 : f32 to vector<16x16xf32>
    %96 = arith.mulf %95, %94 : vector<16x16xf32>
    %97 = arith.addf %92, %96 : vector<16x16xf32>
    %c3_56 = arith.constant 3 : index
    %98 = memref.load %arg5[%c3_56] : memref<9xf32, #tpu.memory_space<smem>>
    %c1_57 = arith.constant 1 : index
    %c0_58 = arith.constant 0 : index
    %99 = vector.load %arg8[%c1_57, %c0_58] : memref<18x18xf32, #tpu.memory_space<vmem>>, vector<16x16xf32>
    %100 = vector.broadcast %98 : f32 to vector<16x16xf32>
    %101 = arith.mulf %100, %99 : vector<16x16xf32>
    %102 = arith.addf %97, %101 : vector<16x16xf32>
    %c4_59 = arith.constant 4 : index
    %103 = memref.load %arg5[%c4_59] : memref<9xf32, #tpu.memory_space<smem>>
    %c1_60 = arith.constant 1 : index
    %c1_61 = arith.constant 1 : index
    %104 = vector.load %arg8[%c1_60, %c1_61] : memref<18x18xf32, #tpu.memory_space<vmem>>, vector<16x16xf32>
    %105 = vector.broadcast %103 : f32 to vector<16x16xf32>
    %106 = arith.mulf %105, %104 : vector<16x16xf32>
    %107 = arith.addf %102, %106 : vector<16x16xf32>
    %c5_62 = arith.constant 5 : index
    %108 = memref.load %arg5[%c5_62] : memref<9xf32, #tpu.memory_space<smem>>
    %c1_63 = arith.constant 1 : index
    %c2_64 = arith.constant 2 : index
    %109 = vector.load %arg8[%c1_63, %c2_64] : memref<18x18xf32, #tpu.memory_space<vmem>>, vector<16x16xf32>
    %110 = vector.broadcast %108 : f32 to vector<16x16xf32>
    %111 = arith.mulf %110, %109 : vector<16x16xf32>
    %112 = arith.addf %107, %111 : vector<16x16xf32>
    %c6_65 = arith.constant 6 : index
    %113 = memref.load %arg5[%c6_65] : memref<9xf32, #tpu.memory_space<smem>>
    %c2_66 = arith.constant 2 : index
    %c0_67 = arith.constant 0 : index
    %114 = vector.load %arg8[%c2_66, %c0_67] : memref<18x18xf32, #tpu.memory_space<vmem>>, vector<16x16xf32>
    %115 = vector.broadcast %113 : f32 to vector<16x16xf32>
    %116 = arith.mulf %115, %114 : vector<16x16xf32>
    %117 = arith.addf %112, %116 : vector<16x16xf32>
    %c7_68 = arith.constant 7 : index
    %118 = memref.load %arg5[%c7_68] : memref<9xf32, #tpu.memory_space<smem>>
    %c2_69 = arith.constant 2 : index
    %c1_70 = arith.constant 1 : index
    %119 = vector.load %arg8[%c2_69, %c1_70] : memref<18x18xf32, #tpu.memory_space<vmem>>, vector<16x16xf32>
    %120 = vector.broadcast %118 : f32 to vector<16x16xf32>
    %121 = arith.mulf %120, %119 : vector<16x16xf32>
    %122 = arith.addf %117, %121 : vector<16x16xf32>
    %c8_71 = arith.constant 8 : index
    %123 = memref.load %arg5[%c8_71] : memref<9xf32, #tpu.memory_space<smem>>
    %c2_72 = arith.constant 2 : index
    %c2_73 = arith.constant 2 : index
    %124 = vector.load %arg8[%c2_72, %c2_73] : memref<18x18xf32, #tpu.memory_space<vmem>>, vector<16x16xf32>
    %125 = vector.broadcast %123 : f32 to vector<16x16xf32>
    %126 = arith.mulf %125, %124 : vector<16x16xf32>
    %127 = arith.addf %122, %126 : vector<16x16xf32>
    %c0_74 = arith.constant 0 : index
    %c0_75 = arith.constant 0 : index
    %c0_76 = arith.constant 0 : index
    %c0_77 = arith.constant 0 : index
    %128 = vector.load %arg6[%c0_74, %c0_75, %c0_76, %c0_77] : memref<1x10x16x16xf32, #tpu.memory_space<vmem>>, vector<1x1x16x16xf32>
    %129 = vector.shape_cast %128 : vector<1x1x16x16xf32> to vector<16x16xf32>
    %130 = vector.shape_cast %127 : vector<16x16xf32> to vector<1x1x16x16xf32>
    tpu.vector_store %arg6[%c0_74, %c0_75, %c0_76, %c0_77], %130 {strides = array<i32>} : memref<1x10x16x16xf32, #tpu.memory_space<vmem>>, vector<1x1x16x16xf32>,
    %c0_78 = arith.constant 0 : index
    %c0_79 = arith.constant 0 : index
    %131 = vector.load %arg7[%c0_78, %c0_79] : memref<18x18xf32, #tpu.memory_space<vmem>>, vector<18x18xf32>
    %c1_80 = arith.constant 1 : index
    %132 = memref.load %arg4[%c1_80] : memref<10xf32, #tpu.memory_space<smem>>
    %133 = vector.broadcast %132 : f32 to vector<18x18xf32>
    %134 = arith.mulf %131, %133 : vector<18x18xf32>
    %cst_81 = arith.constant 1.000000e+00 : f32
    %135 = vector.broadcast %cst_81 : f32 to vector<18x18xf32>
    %136 = arith.addf %135, %134 : vector<18x18xf32>
    %137 = tpu.reciprocal %136 {approx = true} : vector<18x18xf32> -> vector<18x18xf32>
    %138 = arith.mulf %137, %137 : vector<18x18xf32>
    %139 = arith.mulf %134, %138 : vector<18x18xf32>
    %c0_82 = arith.constant 0 : index
    %c0_83 = arith.constant 0 : index
    %140 = vector.load %arg8[%c0_82, %c0_83] : memref<18x18xf32, #tpu.memory_space<vmem>>, vector<18x18xf32>
    tpu.vector_store %arg8[%c0_82, %c0_83], %139 {strides = array<i32>} : memref<18x18xf32, #tpu.memory_space<vmem>>, vector<18x18xf32>,
    %c0_84 = arith.constant 0 : index
    %141 = memref.load %arg5[%c0_84] : memref<9xf32, #tpu.memory_space<smem>>
    %c0_85 = arith.constant 0 : index
    %c0_86 = arith.constant 0 : index
    %142 = vector.load %arg8[%c0_85, %c0_86] : memref<18x18xf32, #tpu.memory_space<vmem>>, vector<16x16xf32>
    %143 = vector.broadcast %141 : f32 to vector<16x16xf32>
    %144 = arith.mulf %143, %142 : vector<16x16xf32>
    %c1_87 = arith.constant 1 : index
    %145 = memref.load %arg5[%c1_87] : memref<9xf32, #tpu.memory_space<smem>>
    %c0_88 = arith.constant 0 : index
    %c1_89 = arith.constant 1 : index
    %146 = vector.load %arg8[%c0_88, %c1_89] : memref<18x18xf32, #tpu.memory_space<vmem>>, vector<16x16xf32>
    %147 = vector.broadcast %145 : f32 to vector<16x16xf32>
    %148 = arith.mulf %147, %146 : vector<16x16xf32>
    %149 = arith.addf %144, %148 : vector<16x16xf32>
    %c2_90 = arith.constant 2 : index
    %150 = memref.load %arg5[%c2_90] : memref<9xf32, #tpu.memory_space<smem>>
    %c0_91 = arith.constant 0 : index
    %c2_92 = arith.constant 2 : index
    %151 = vector.load %arg8[%c0_91, %c2_92] : memref<18x18xf32, #tpu.memory_space<vmem>>, vector<16x16xf32>
    %152 = vector.broadcast %150 : f32 to vector<16x16xf32>
    %153 = arith.mulf %152, %151 : vector<16x16xf32>
    %154 = arith.addf %149, %153 : vector<16x16xf32>
    %c3_93 = arith.constant 3 : index
    %155 = memref.load %arg5[%c3_93] : memref<9xf32, #tpu.memory_space<smem>>
    %c1_94 = arith.constant 1 : index
    %c0_95 = arith.constant 0 : index
    %156 = vector.load %arg8[%c1_94, %c0_95] : memref<18x18xf32, #tpu.memory_space<vmem>>, vector<16x16xf32>
    %157 = vector.broadcast %155 : f32 to vector<16x16xf32>
    %158 = arith.mulf %157, %156 : vector<16x16xf32>
    %159 = arith.addf %154, %158 : vector<16x16xf32>
    %c4_96 = arith.constant 4 : index
    %160 = memref.load %arg5[%c4_96] : memref<9xf32, #tpu.memory_space<smem>>
    %c1_97 = arith.constant 1 : index
    %c1_98 = arith.constant 1 : index
    %161 = vector.load %arg8[%c1_97, %c1_98] : memref<18x18xf32, #tpu.memory_space<vmem>>, vector<16x16xf32>
    %162 = vector.broadcast %160 : f32 to vector<16x16xf32>
    %163 = arith.mulf %162, %161 : vector<16x16xf32>
    %164 = arith.addf %159, %163 : vector<16x16xf32>
    %c5_99 = arith.constant 5 : index
    %165 = memref.load %arg5[%c5_99] : memref<9xf32, #tpu.memory_space<smem>>
    %c1_100 = arith.constant 1 : index
    %c2_101 = arith.constant 2 : index
    %166 = vector.load %arg8[%c1_100, %c2_101] : memref<18x18xf32, #tpu.memory_space<vmem>>, vector<16x16xf32>
    %167 = vector.broadcast %165 : f32 to vector<16x16xf32>
    %168 = arith.mulf %167, %166 : vector<16x16xf32>
    %169 = arith.addf %164, %168 : vector<16x16xf32>
    %c6_102 = arith.constant 6 : index
    %170 = memref.load %arg5[%c6_102] : memref<9xf32, #tpu.memory_space<smem>>
    %c2_103 = arith.constant 2 : index
    %c0_104 = arith.constant 0 : index
    %171 = vector.load %arg8[%c2_103, %c0_104] : memref<18x18xf32, #tpu.memory_space<vmem>>, vector<16x16xf32>
    %172 = vector.broadcast %170 : f32 to vector<16x16xf32>
    %173 = arith.mulf %172, %171 : vector<16x16xf32>
    %174 = arith.addf %169, %173 : vector<16x16xf32>
    %c7_105 = arith.constant 7 : index
    %175 = memref.load %arg5[%c7_105] : memref<9xf32, #tpu.memory_space<smem>>
    %c2_106 = arith.constant 2 : index
    %c1_107 = arith.constant 1 : index
    %176 = vector.load %arg8[%c2_106, %c1_107] : memref<18x18xf32, #tpu.memory_space<vmem>>, vector<16x16xf32>
    %177 = vector.broadcast %175 : f32 to vector<16x16xf32>
    %178 = arith.mulf %177, %176 : vector<16x16xf32>
    %179 = arith.addf %174, %178 : vector<16x16xf32>
    %c8_108 = arith.constant 8 : index
    %180 = memref.load %arg5[%c8_108] : memref<9xf32, #tpu.memory_space<smem>>
    %c2_109 = arith.constant 2 : index
    %c2_110 = arith.constant 2 : index
    %181 = vector.load %arg8[%c2_109, %c2_110] : memref<18x18xf32, #tpu.memory_space<vmem>>, vector<16x16xf32>
    %182 = vector.broadcast %180 : f32 to vector<16x16xf32>
    %183 = arith.mulf %182, %181 : vector<16x16xf32>
    %184 = arith.addf %179, %183 : vector<16x16xf32>
    %c0_111 = arith.constant 0 : index
    %c1_112 = arith.constant 1 : index
    %c0_113 = arith.constant 0 : index
    %c0_114 = arith.constant 0 : index
    %185 = vector.load %arg6[%c0_111, %c1_112, %c0_113, %c0_114] : memref<1x10x16x16xf32, #tpu.memory_space<vmem>>, vector<1x1x16x16xf32>
    %186 = vector.shape_cast %185 : vector<1x1x16x16xf32> to vector<16x16xf32>
    %187 = vector.shape_cast %184 : vector<16x16xf32> to vector<1x1x16x16xf32>
    tpu.vector_store %arg6[%c0_111, %c1_112, %c0_113, %c0_114], %187 {strides = array<i32>} : memref<1x10x16x16xf32, #tpu.memory_space<vmem>>, vector<1x1x16x16xf32>,
    %c0_115 = arith.constant 0 : index
    %c0_116 = arith.constant 0 : index
    %188 = vector.load %arg7[%c0_115, %c0_116] : memref<18x18xf32, #tpu.memory_space<vmem>>, vector<18x18xf32>
    %c2_117 = arith.constant 2 : index
    %189 = memref.load %arg4[%c2_117] : memref<10xf32, #tpu.memory_space<smem>>
    %190 = vector.broadcast %189 : f32 to vector<18x18xf32>
    %191 = arith.mulf %188, %190 : vector<18x18xf32>
    %cst_118 = arith.constant 1.000000e+00 : f32
    %192 = vector.broadcast %cst_118 : f32 to vector<18x18xf32>
    %193 = arith.addf %192, %191 : vector<18x18xf32>
    %194 = tpu.reciprocal %193 {approx = true} : vector<18x18xf32> -> vector<18x18xf32>
    %195 = arith.mulf %194, %194 : vector<18x18xf32>
    %196 = arith.mulf %191, %195 : vector<18x18xf32>
    %c0_119 = arith.constant 0 : index
    %c0_120 = arith.constant 0 : index
    %197 = vector.load %arg8[%c0_119, %c0_120] : memref<18x18xf32, #tpu.memory_space<vmem>>, vector<18x18xf32>
    tpu.vector_store %arg8[%c0_119, %c0_120], %196 {strides = array<i32>} : memref<18x18xf32, #tpu.memory_space<vmem>>, vector<18x18xf32>,
    %c0_121 = arith.constant 0 : index
    %198 = memref.load %arg5[%c0_121] : memref<9xf32, #tpu.memory_space<smem>>
    %c0_122 = arith.constant 0 : index
    %c0_123 = arith.constant 0 : index
    %199 = vector.load %arg8[%c0_122, %c0_123] : memref<18x18xf32, #tpu.memory_space<vmem>>, vector<16x16xf32>
    %200 = vector.broadcast %198 : f32 to vector<16x16xf32>
    %201 = arith.mulf %200, %199 : vector<16x16xf32>
    %c1_124 = arith.constant 1 : index
    %202 = memref.load %arg5[%c1_124] : memref<9xf32, #tpu.memory_space<smem>>
    %c0_125 = arith.constant 0 : index
    %c1_126 = arith.constant 1 : index
    %203 = vector.load %arg8[%c0_125, %c1_126] : memref<18x18xf32, #tpu.memory_space<vmem>>, vector<16x16xf32>
    %204 = vector.broadcast %202 : f32 to vector<16x16xf32>
    %205 = arith.mulf %204, %203 : vector<16x16xf32>
    %206 = arith.addf %201, %205 : vector<16x16xf32>
    %c2_127 = arith.constant 2 : index
    %207 = memref.load %arg5[%c2_127] : memref<9xf32, #tpu.memory_space<smem>>
    %c0_128 = arith.constant 0 : index
    %c2_129 = arith.constant 2 : index
    %208 = vector.load %arg8[%c0_128, %c2_129] : memref<18x18xf32, #tpu.memory_space<vmem>>, vector<16x16xf32>
    %209 = vector.broadcast %207 : f32 to vector<16x16xf32>
    %210 = arith.mulf %209, %208 : vector<16x16xf32>
    %211 = arith.addf %206, %210 : vector<16x16xf32>
    %c3_130 = arith.constant 3 : index
    %212 = memref.load %arg5[%c3_130] : memref<9xf32, #tpu.memory_space<smem>>
    %c1_131 = arith.constant 1 : index
    %c0_132 = arith.constant 0 : index
    %213 = vector.load %arg8[%c1_131, %c0_132] : memref<18x18xf32, #tpu.memory_space<vmem>>, vector<16x16xf32>
    %214 = vector.broadcast %212 : f32 to vector<16x16xf32>
    %215 = arith.mulf %214, %213 : vector<16x16xf32>
    %216 = arith.addf %211, %215 : vector<16x16xf32>
    %c4_133 = arith.constant 4 : index
    %217 = memref.load %arg5[%c4_133] : memref<9xf32, #tpu.memory_space<smem>>
    %c1_134 = arith.constant 1 : index
    %c1_135 = arith.constant 1 : index
    %218 = vector.load %arg8[%c1_134, %c1_135] : memref<18x18xf32, #tpu.memory_space<vmem>>, vector<16x16xf32>
    %219 = vector.broadcast %217 : f32 to vector<16x16xf32>
    %220 = arith.mulf %219, %218 : vector<16x16xf32>
    %221 = arith.addf %216, %220 : vector<16x16xf32>
    %c5_136 = arith.constant 5 : index
    %222 = memref.load %arg5[%c5_136] : memref<9xf32, #tpu.memory_space<smem>>
    %c1_137 = arith.constant 1 : index
    %c2_138 = arith.constant 2 : index
    %223 = vector.load %arg8[%c1_137, %c2_138] : memref<18x18xf32, #tpu.memory_space<vmem>>, vector<16x16xf32>
    %224 = vector.broadcast %222 : f32 to vector<16x16xf32>
    %225 = arith.mulf %224, %223 : vector<16x16xf32>
    %226 = arith.addf %221, %225 : vector<16x16xf32>
    %c6_139 = arith.constant 6 : index
    %227 = memref.load %arg5[%c6_139] : memref<9xf32, #tpu.memory_space<smem>>
    %c2_140 = arith.constant 2 : index
    %c0_141 = arith.constant 0 : index
    %228 = vector.load %arg8[%c2_140, %c0_141] : memref<18x18xf32, #tpu.memory_space<vmem>>, vector<16x16xf32>
    %229 = vector.broadcast %227 : f32 to vector<16x16xf32>
    %230 = arith.mulf %229, %228 : vector<16x16xf32>
    %231 = arith.addf %226, %230 : vector<16x16xf32>
    %c7_142 = arith.constant 7 : index
    %232 = memref.load %arg5[%c7_142] : memref<9xf32, #tpu.memory_space<smem>>
    %c2_143 = arith.constant 2 : index
    %c1_144 = arith.constant 1 : index
    %233 = vector.load %arg8[%c2_143, %c1_144] : memref<18x18xf32, #tpu.memory_space<vmem>>, vector<16x16xf32>
    %234 = vector.broadcast %232 : f32 to vector<16x16xf32>
    %235 = arith.mulf %234, %233 : vector<16x16xf32>
    %236 = arith.addf %231, %235 : vector<16x16xf32>
    %c8_145 = arith.constant 8 : index
    %237 = memref.load %arg5[%c8_145] : memref<9xf32, #tpu.memory_space<smem>>
    %c2_146 = arith.constant 2 : index
    %c2_147 = arith.constant 2 : index
    %238 = vector.load %arg8[%c2_146, %c2_147] : memref<18x18xf32, #tpu.memory_space<vmem>>, vector<16x16xf32>
    %239 = vector.broadcast %237 : f32 to vector<16x16xf32>
    %240 = arith.mulf %239, %238 : vector<16x16xf32>
    %241 = arith.addf %236, %240 : vector<16x16xf32>
    %c0_148 = arith.constant 0 : index
    %c2_149 = arith.constant 2 : index
    %c0_150 = arith.constant 0 : index
    %c0_151 = arith.constant 0 : index
    %242 = vector.load %arg6[%c0_148, %c2_149, %c0_150, %c0_151] : memref<1x10x16x16xf32, #tpu.memory_space<vmem>>, vector<1x1x16x16xf32>
    %243 = vector.shape_cast %242 : vector<1x1x16x16xf32> to vector<16x16xf32>
    %244 = vector.shape_cast %241 : vector<16x16xf32> to vector<1x1x16x16xf32>
    tpu.vector_store %arg6[%c0_148, %c2_149, %c0_150, %c0_151], %244 {strides = array<i32>} : memref<1x10x16x16xf32, #tpu.memory_space<vmem>>, vector<1x1x16x16xf32>,
    %c0_152 = arith.constant 0 : index
    %c0_153 = arith.constant 0 : index
    %245 = vector.load %arg7[%c0_152, %c0_153] : memref<18x18xf32, #tpu.memory_space<vmem>>, vector<18x18xf32>
    %c3_154 = arith.constant 3 : index
    %246 = memref.load %arg4[%c3_154] : memref<10xf32, #tpu.memory_space<smem>>
    %247 = vector.broadcast %246 : f32 to vector<18x18xf32>
    %248 = arith.mulf %245, %247 : vector<18x18xf32>
    %cst_155 = arith.constant 1.000000e+00 : f32
    %249 = vector.broadcast %cst_155 : f32 to vector<18x18xf32>
    %250 = arith.addf %249, %248 : vector<18x18xf32>
    %251 = tpu.reciprocal %250 {approx = true} : vector<18x18xf32> -> vector<18x18xf32>
    %252 = arith.mulf %251, %251 : vector<18x18xf32>
    %253 = arith.mulf %248, %252 : vector<18x18xf32>
    %c0_156 = arith.constant 0 : index
    %c0_157 = arith.constant 0 : index
    %254 = vector.load %arg8[%c0_156, %c0_157] : memref<18x18xf32, #tpu.memory_space<vmem>>, vector<18x18xf32>
    tpu.vector_store %arg8[%c0_156, %c0_157], %253 {strides = array<i32>} : memref<18x18xf32, #tpu.memory_space<vmem>>, vector<18x18xf32>,
    %c0_158 = arith.constant 0 : index
    %255 = memref.load %arg5[%c0_158] : memref<9xf32, #tpu.memory_space<smem>>
    %c0_159 = arith.constant 0 : index
    %c0_160 = arith.constant 0 : index
    %256 = vector.load %arg8[%c0_159, %c0_160] : memref<18x18xf32, #tpu.memory_space<vmem>>, vector<16x16xf32>
    %257 = vector.broadcast %255 : f32 to vector<16x16xf32>
    %258 = arith.mulf %257, %256 : vector<16x16xf32>
    %c1_161 = arith.constant 1 : index
    %259 = memref.load %arg5[%c1_161] : memref<9xf32, #tpu.memory_space<smem>>
    %c0_162 = arith.constant 0 : index
    %c1_163 = arith.constant 1 : index
    %260 = vector.load %arg8[%c0_162, %c1_163] : memref<18x18xf32, #tpu.memory_space<vmem>>, vector<16x16xf32>
    %261 = vector.broadcast %259 : f32 to vector<16x16xf32>
    %262 = arith.mulf %261, %260 : vector<16x16xf32>
    %263 = arith.addf %258, %262 : vector<16x16xf32>
    %c2_164 = arith.constant 2 : index
    %264 = memref.load %arg5[%c2_164] : memref<9xf32, #tpu.memory_space<smem>>
    %c0_165 = arith.constant 0 : index
    %c2_166 = arith.constant 2 : index
    %265 = vector.load %arg8[%c0_165, %c2_166] : memref<18x18xf32, #tpu.memory_space<vmem>>, vector<16x16xf32>
    %266 = vector.broadcast %264 : f32 to vector<16x16xf32>
    %267 = arith.mulf %266, %265 : vector<16x16xf32>
    %268 = arith.addf %263, %267 : vector<16x16xf32>
    %c3_167 = arith.constant 3 : index
    %269 = memref.load %arg5[%c3_167] : memref<9xf32, #tpu.memory_space<smem>>
    %c1_168 = arith.constant 1 : index
    %c0_169 = arith.constant 0 : index
    %270 = vector.load %arg8[%c1_168, %c0_169] : memref<18x18xf32, #tpu.memory_space<vmem>>, vector<16x16xf32>
    %271 = vector.broadcast %269 : f32 to vector<16x16xf32>
    %272 = arith.mulf %271, %270 : vector<16x16xf32>
    %273 = arith.addf %268, %272 : vector<16x16xf32>
    %c4_170 = arith.constant 4 : index
    %274 = memref.load %arg5[%c4_170] : memref<9xf32, #tpu.memory_space<smem>>
    %c1_171 = arith.constant 1 : index
    %c1_172 = arith.constant 1 : index
    %275 = vector.load %arg8[%c1_171, %c1_172] : memref<18x18xf32, #tpu.memory_space<vmem>>, vector<16x16xf32>
    %276 = vector.broadcast %274 : f32 to vector<16x16xf32>
    %277 = arith.mulf %276, %275 : vector<16x16xf32>
    %278 = arith.addf %273, %277 : vector<16x16xf32>
    %c5_173 = arith.constant 5 : index
    %279 = memref.load %arg5[%c5_173] : memref<9xf32, #tpu.memory_space<smem>>
    %c1_174 = arith.constant 1 : index
    %c2_175 = arith.constant 2 : index
    %280 = vector.load %arg8[%c1_174, %c2_175] : memref<18x18xf32, #tpu.memory_space<vmem>>, vector<16x16xf32>
    %281 = vector.broadcast %279 : f32 to vector<16x16xf32>
    %282 = arith.mulf %281, %280 : vector<16x16xf32>
    %283 = arith.addf %278, %282 : vector<16x16xf32>
    %c6_176 = arith.constant 6 : index
    %284 = memref.load %arg5[%c6_176] : memref<9xf32, #tpu.memory_space<smem>>
    %c2_177 = arith.constant 2 : index
    %c0_178 = arith.constant 0 : index
    %285 = vector.load %arg8[%c2_177, %c0_178] : memref<18x18xf32, #tpu.memory_space<vmem>>, vector<16x16xf32>
    %286 = vector.broadcast %284 : f32 to vector<16x16xf32>
    %287 = arith.mulf %286, %285 : vector<16x16xf32>
    %288 = arith.addf %283, %287 : vector<16x16xf32>
    %c7_179 = arith.constant 7 : index
    %289 = memref.load %arg5[%c7_179] : memref<9xf32, #tpu.memory_space<smem>>
    %c2_180 = arith.constant 2 : index
    %c1_181 = arith.constant 1 : index
    %290 = vector.load %arg8[%c2_180, %c1_181] : memref<18x18xf32, #tpu.memory_space<vmem>>, vector<16x16xf32>
    %291 = vector.broadcast %289 : f32 to vector<16x16xf32>
    %292 = arith.mulf %291, %290 : vector<16x16xf32>
    %293 = arith.addf %288, %292 : vector<16x16xf32>
    %c8_182 = arith.constant 8 : index
    %294 = memref.load %arg5[%c8_182] : memref<9xf32, #tpu.memory_space<smem>>
    %c2_183 = arith.constant 2 : index
    %c2_184 = arith.constant 2 : index
    %295 = vector.load %arg8[%c2_183, %c2_184] : memref<18x18xf32, #tpu.memory_space<vmem>>, vector<16x16xf32>
    %296 = vector.broadcast %294 : f32 to vector<16x16xf32>
    %297 = arith.mulf %296, %295 : vector<16x16xf32>
    %298 = arith.addf %293, %297 : vector<16x16xf32>
    %c0_185 = arith.constant 0 : index
    %c3_186 = arith.constant 3 : index
    %c0_187 = arith.constant 0 : index
    %c0_188 = arith.constant 0 : index
    %299 = vector.load %arg6[%c0_185, %c3_186, %c0_187, %c0_188] : memref<1x10x16x16xf32, #tpu.memory_space<vmem>>, vector<1x1x16x16xf32>
    %300 = vector.shape_cast %299 : vector<1x1x16x16xf32> to vector<16x16xf32>
    %301 = vector.shape_cast %298 : vector<16x16xf32> to vector<1x1x16x16xf32>
    tpu.vector_store %arg6[%c0_185, %c3_186, %c0_187, %c0_188], %301 {strides = array<i32>} : memref<1x10x16x16xf32, #tpu.memory_space<vmem>>, vector<1x1x16x16xf32>,
    %c0_189 = arith.constant 0 : index
    %c0_190 = arith.constant 0 : index
    %302 = vector.load %arg7[%c0_189, %c0_190] : memref<18x18xf32, #tpu.memory_space<vmem>>, vector<18x18xf32>
    %c4_191 = arith.constant 4 : index
    %303 = memref.load %arg4[%c4_191] : memref<10xf32, #tpu.memory_space<smem>>
    %304 = vector.broadcast %303 : f32 to vector<18x18xf32>
    %305 = arith.mulf %302, %304 : vector<18x18xf32>
    %cst_192 = arith.constant 1.000000e+00 : f32
    %306 = vector.broadcast %cst_192 : f32 to vector<18x18xf32>
    %307 = arith.addf %306, %305 : vector<18x18xf32>
    %308 = tpu.reciprocal %307 {approx = true} : vector<18x18xf32> -> vector<18x18xf32>
    %309 = arith.mulf %308, %308 : vector<18x18xf32>
    %310 = arith.mulf %305, %309 : vector<18x18xf32>
    %c0_193 = arith.constant 0 : index
    %c0_194 = arith.constant 0 : index
    %311 = vector.load %arg8[%c0_193, %c0_194] : memref<18x18xf32, #tpu.memory_space<vmem>>, vector<18x18xf32>
    tpu.vector_store %arg8[%c0_193, %c0_194], %310 {strides = array<i32>} : memref<18x18xf32, #tpu.memory_space<vmem>>, vector<18x18xf32>,
    %c0_195 = arith.constant 0 : index
    %312 = memref.load %arg5[%c0_195] : memref<9xf32, #tpu.memory_space<smem>>
    %c0_196 = arith.constant 0 : index
    %c0_197 = arith.constant 0 : index
    %313 = vector.load %arg8[%c0_196, %c0_197] : memref<18x18xf32, #tpu.memory_space<vmem>>, vector<16x16xf32>
    %314 = vector.broadcast %312 : f32 to vector<16x16xf32>
    %315 = arith.mulf %314, %313 : vector<16x16xf32>
    %c1_198 = arith.constant 1 : index
    %316 = memref.load %arg5[%c1_198] : memref<9xf32, #tpu.memory_space<smem>>
    %c0_199 = arith.constant 0 : index
    %c1_200 = arith.constant 1 : index
    %317 = vector.load %arg8[%c0_199, %c1_200] : memref<18x18xf32, #tpu.memory_space<vmem>>, vector<16x16xf32>
    %318 = vector.broadcast %316 : f32 to vector<16x16xf32>
    %319 = arith.mulf %318, %317 : vector<16x16xf32>
    %320 = arith.addf %315, %319 : vector<16x16xf32>
    %c2_201 = arith.constant 2 : index
    %321 = memref.load %arg5[%c2_201] : memref<9xf32, #tpu.memory_space<smem>>
    %c0_202 = arith.constant 0 : index
    %c2_203 = arith.constant 2 : index
    %322 = vector.load %arg8[%c0_202, %c2_203] : memref<18x18xf32, #tpu.memory_space<vmem>>, vector<16x16xf32>
    %323 = vector.broadcast %321 : f32 to vector<16x16xf32>
    %324 = arith.mulf %323, %322 : vector<16x16xf32>
    %325 = arith.addf %320, %324 : vector<16x16xf32>
    %c3_204 = arith.constant 3 : index
    %326 = memref.load %arg5[%c3_204] : memref<9xf32, #tpu.memory_space<smem>>
    %c1_205 = arith.constant 1 : index
    %c0_206 = arith.constant 0 : index
    %327 = vector.load %arg8[%c1_205, %c0_206] : memref<18x18xf32, #tpu.memory_space<vmem>>, vector<16x16xf32>
    %328 = vector.broadcast %326 : f32 to vector<16x16xf32>
    %329 = arith.mulf %328, %327 : vector<16x16xf32>
    %330 = arith.addf %325, %329 : vector<16x16xf32>
    %c4_207 = arith.constant 4 : index
    %331 = memref.load %arg5[%c4_207] : memref<9xf32, #tpu.memory_space<smem>>
    %c1_208 = arith.constant 1 : index
    %c1_209 = arith.constant 1 : index
    %332 = vector.load %arg8[%c1_208, %c1_209] : memref<18x18xf32, #tpu.memory_space<vmem>>, vector<16x16xf32>
    %333 = vector.broadcast %331 : f32 to vector<16x16xf32>
    %334 = arith.mulf %333, %332 : vector<16x16xf32>
    %335 = arith.addf %330, %334 : vector<16x16xf32>
    %c5_210 = arith.constant 5 : index
    %336 = memref.load %arg5[%c5_210] : memref<9xf32, #tpu.memory_space<smem>>
    %c1_211 = arith.constant 1 : index
    %c2_212 = arith.constant 2 : index
    %337 = vector.load %arg8[%c1_211, %c2_212] : memref<18x18xf32, #tpu.memory_space<vmem>>, vector<16x16xf32>
    %338 = vector.broadcast %336 : f32 to vector<16x16xf32>
    %339 = arith.mulf %338, %337 : vector<16x16xf32>
    %340 = arith.addf %335, %339 : vector<16x16xf32>
    %c6_213 = arith.constant 6 : index
    %341 = memref.load %arg5[%c6_213] : memref<9xf32, #tpu.memory_space<smem>>
    %c2_214 = arith.constant 2 : index
    %c0_215 = arith.constant 0 : index
    %342 = vector.load %arg8[%c2_214, %c0_215] : memref<18x18xf32, #tpu.memory_space<vmem>>, vector<16x16xf32>
    %343 = vector.broadcast %341 : f32 to vector<16x16xf32>
    %344 = arith.mulf %343, %342 : vector<16x16xf32>
    %345 = arith.addf %340, %344 : vector<16x16xf32>
    %c7_216 = arith.constant 7 : index
    %346 = memref.load %arg5[%c7_216] : memref<9xf32, #tpu.memory_space<smem>>
    %c2_217 = arith.constant 2 : index
    %c1_218 = arith.constant 1 : index
    %347 = vector.load %arg8[%c2_217, %c1_218] : memref<18x18xf32, #tpu.memory_space<vmem>>, vector<16x16xf32>
    %348 = vector.broadcast %346 : f32 to vector<16x16xf32>
    %349 = arith.mulf %348, %347 : vector<16x16xf32>
    %350 = arith.addf %345, %349 : vector<16x16xf32>
    %c8_219 = arith.constant 8 : index
    %351 = memref.load %arg5[%c8_219] : memref<9xf32, #tpu.memory_space<smem>>
    %c2_220 = arith.constant 2 : index
    %c2_221 = arith.constant 2 : index
    %352 = vector.load %arg8[%c2_220, %c2_221] : memref<18x18xf32, #tpu.memory_space<vmem>>, vector<16x16xf32>
    %353 = vector.broadcast %351 : f32 to vector<16x16xf32>
    %354 = arith.mulf %353, %352 : vector<16x16xf32>
    %355 = arith.addf %350, %354 : vector<16x16xf32>
    %c0_222 = arith.constant 0 : index
    %c4_223 = arith.constant 4 : index
    %c0_224 = arith.constant 0 : index
    %c0_225 = arith.constant 0 : index
    %356 = vector.load %arg6[%c0_222, %c4_223, %c0_224, %c0_225] : memref<1x10x16x16xf32, #tpu.memory_space<vmem>>, vector<1x1x16x16xf32>
    %357 = vector.shape_cast %356 : vector<1x1x16x16xf32> to vector<16x16xf32>
    %358 = vector.shape_cast %355 : vector<16x16xf32> to vector<1x1x16x16xf32>
    tpu.vector_store %arg6[%c0_222, %c4_223, %c0_224, %c0_225], %358 {strides = array<i32>} : memref<1x10x16x16xf32, #tpu.memory_space<vmem>>, vector<1x1x16x16xf32>,
    %c0_226 = arith.constant 0 : index
    %c0_227 = arith.constant 0 : index
    %359 = vector.load %arg7[%c0_226, %c0_227] : memref<18x18xf32, #tpu.memory_space<vmem>>, vector<18x18xf32>
    %c5_228 = arith.constant 5 : index
    %360 = memref.load %arg4[%c5_228] : memref<10xf32, #tpu.memory_space<smem>>
    %361 = vector.broadcast %360 : f32 to vector<18x18xf32>
    %362 = arith.mulf %359, %361 : vector<18x18xf32>
    %cst_229 = arith.constant 1.000000e+00 : f32
    %363 = vector.broadcast %cst_229 : f32 to vector<18x18xf32>
    %364 = arith.addf %363, %362 : vector<18x18xf32>
    %365 = tpu.reciprocal %364 {approx = true} : vector<18x18xf32> -> vector<18x18xf32>
    %366 = arith.mulf %365, %365 : vector<18x18xf32>
    %367 = arith.mulf %362, %366 : vector<18x18xf32>
    %c0_230 = arith.constant 0 : index
    %c0_231 = arith.constant 0 : index
    %368 = vector.load %arg8[%c0_230, %c0_231] : memref<18x18xf32, #tpu.memory_space<vmem>>, vector<18x18xf32>
    tpu.vector_store %arg8[%c0_230, %c0_231], %367 {strides = array<i32>} : memref<18x18xf32, #tpu.memory_space<vmem>>, vector<18x18xf32>,
    %c0_232 = arith.constant 0 : index
    %369 = memref.load %arg5[%c0_232] : memref<9xf32, #tpu.memory_space<smem>>
    %c0_233 = arith.constant 0 : index
    %c0_234 = arith.constant 0 : index
    %370 = vector.load %arg8[%c0_233, %c0_234] : memref<18x18xf32, #tpu.memory_space<vmem>>, vector<16x16xf32>
    %371 = vector.broadcast %369 : f32 to vector<16x16xf32>
    %372 = arith.mulf %371, %370 : vector<16x16xf32>
    %c1_235 = arith.constant 1 : index
    %373 = memref.load %arg5[%c1_235] : memref<9xf32, #tpu.memory_space<smem>>
    %c0_236 = arith.constant 0 : index
    %c1_237 = arith.constant 1 : index
    %374 = vector.load %arg8[%c0_236, %c1_237] : memref<18x18xf32, #tpu.memory_space<vmem>>, vector<16x16xf32>
    %375 = vector.broadcast %373 : f32 to vector<16x16xf32>
    %376 = arith.mulf %375, %374 : vector<16x16xf32>
    %377 = arith.addf %372, %376 : vector<16x16xf32>
    %c2_238 = arith.constant 2 : index
    %378 = memref.load %arg5[%c2_238] : memref<9xf32, #tpu.memory_space<smem>>
    %c0_239 = arith.constant 0 : index
    %c2_240 = arith.constant 2 : index
    %379 = vector.load %arg8[%c0_239, %c2_240] : memref<18x18xf32, #tpu.memory_space<vmem>>, vector<16x16xf32>
    %380 = vector.broadcast %378 : f32 to vector<16x16xf32>
    %381 = arith.mulf %380, %379 : vector<16x16xf32>
    %382 = arith.addf %377, %381 : vector<16x16xf32>
    %c3_241 = arith.constant 3 : index
    %383 = memref.load %arg5[%c3_241] : memref<9xf32, #tpu.memory_space<smem>>
    %c1_242 = arith.constant 1 : index
    %c0_243 = arith.constant 0 : index
    %384 = vector.load %arg8[%c1_242, %c0_243] : memref<18x18xf32, #tpu.memory_space<vmem>>, vector<16x16xf32>
    %385 = vector.broadcast %383 : f32 to vector<16x16xf32>
    %386 = arith.mulf %385, %384 : vector<16x16xf32>
    %387 = arith.addf %382, %386 : vector<16x16xf32>
    %c4_244 = arith.constant 4 : index
    %388 = memref.load %arg5[%c4_244] : memref<9xf32, #tpu.memory_space<smem>>
    %c1_245 = arith.constant 1 : index
    %c1_246 = arith.constant 1 : index
    %389 = vector.load %arg8[%c1_245, %c1_246] : memref<18x18xf32, #tpu.memory_space<vmem>>, vector<16x16xf32>
    %390 = vector.broadcast %388 : f32 to vector<16x16xf32>
    %391 = arith.mulf %390, %389 : vector<16x16xf32>
    %392 = arith.addf %387, %391 : vector<16x16xf32>
    %c5_247 = arith.constant 5 : index
    %393 = memref.load %arg5[%c5_247] : memref<9xf32, #tpu.memory_space<smem>>
    %c1_248 = arith.constant 1 : index
    %c2_249 = arith.constant 2 : index
    %394 = vector.load %arg8[%c1_248, %c2_249] : memref<18x18xf32, #tpu.memory_space<vmem>>, vector<16x16xf32>
    %395 = vector.broadcast %393 : f32 to vector<16x16xf32>
    %396 = arith.mulf %395, %394 : vector<16x16xf32>
    %397 = arith.addf %392, %396 : vector<16x16xf32>
    %c6_250 = arith.constant 6 : index
    %398 = memref.load %arg5[%c6_250] : memref<9xf32, #tpu.memory_space<smem>>
    %c2_251 = arith.constant 2 : index
    %c0_252 = arith.constant 0 : index
    %399 = vector.load %arg8[%c2_251, %c0_252] : memref<18x18xf32, #tpu.memory_space<vmem>>, vector<16x16xf32>
    %400 = vector.broadcast %398 : f32 to vector<16x16xf32>
    %401 = arith.mulf %400, %399 : vector<16x16xf32>
    %402 = arith.addf %397, %401 : vector<16x16xf32>
    %c7_253 = arith.constant 7 : index
    %403 = memref.load %arg5[%c7_253] : memref<9xf32, #tpu.memory_space<smem>>
    %c2_254 = arith.constant 2 : index
    %c1_255 = arith.constant 1 : index
    %404 = vector.load %arg8[%c2_254, %c1_255] : memref<18x18xf32, #tpu.memory_space<vmem>>, vector<16x16xf32>
    %405 = vector.broadcast %403 : f32 to vector<16x16xf32>
    %406 = arith.mulf %405, %404 : vector<16x16xf32>
    %407 = arith.addf %402, %406 : vector<16x16xf32>
    %c8_256 = arith.constant 8 : index
    %408 = memref.load %arg5[%c8_256] : memref<9xf32, #tpu.memory_space<smem>>
    %c2_257 = arith.constant 2 : index
    %c2_258 = arith.constant 2 : index
    %409 = vector.load %arg8[%c2_257, %c2_258] : memref<18x18xf32, #tpu.memory_space<vmem>>, vector<16x16xf32>
    %410 = vector.broadcast %408 : f32 to vector<16x16xf32>
    %411 = arith.mulf %410, %409 : vector<16x16xf32>
    %412 = arith.addf %407, %411 : vector<16x16xf32>
    %c0_259 = arith.constant 0 : index
    %c5_260 = arith.constant 5 : index
    %c0_261 = arith.constant 0 : index
    %c0_262 = arith.constant 0 : index
    %413 = vector.load %arg6[%c0_259, %c5_260, %c0_261, %c0_262] : memref<1x10x16x16xf32, #tpu.memory_space<vmem>>, vector<1x1x16x16xf32>
    %414 = vector.shape_cast %413 : vector<1x1x16x16xf32> to vector<16x16xf32>
    %415 = vector.shape_cast %412 : vector<16x16xf32> to vector<1x1x16x16xf32>
    tpu.vector_store %arg6[%c0_259, %c5_260, %c0_261, %c0_262], %415 {strides = array<i32>} : memref<1x10x16x16xf32, #tpu.memory_space<vmem>>, vector<1x1x16x16xf32>,
    %c0_263 = arith.constant 0 : index
    %c0_264 = arith.constant 0 : index
    %416 = vector.load %arg7[%c0_263, %c0_264] : memref<18x18xf32, #tpu.memory_space<vmem>>, vector<18x18xf32>
    %c6_265 = arith.constant 6 : index
    %417 = memref.load %arg4[%c6_265] : memref<10xf32, #tpu.memory_space<smem>>
    %418 = vector.broadcast %417 : f32 to vector<18x18xf32>
    %419 = arith.mulf %416, %418 : vector<18x18xf32>
    %cst_266 = arith.constant 1.000000e+00 : f32
    %420 = vector.broadcast %cst_266 : f32 to vector<18x18xf32>
    %421 = arith.addf %420, %419 : vector<18x18xf32>
    %422 = tpu.reciprocal %421 {approx = true} : vector<18x18xf32> -> vector<18x18xf32>
    %423 = arith.mulf %422, %422 : vector<18x18xf32>
    %424 = arith.mulf %419, %423 : vector<18x18xf32>
    %c0_267 = arith.constant 0 : index
    %c0_268 = arith.constant 0 : index
    %425 = vector.load %arg8[%c0_267, %c0_268] : memref<18x18xf32, #tpu.memory_space<vmem>>, vector<18x18xf32>
    tpu.vector_store %arg8[%c0_267, %c0_268], %424 {strides = array<i32>} : memref<18x18xf32, #tpu.memory_space<vmem>>, vector<18x18xf32>,
    %c0_269 = arith.constant 0 : index
    %426 = memref.load %arg5[%c0_269] : memref<9xf32, #tpu.memory_space<smem>>
    %c0_270 = arith.constant 0 : index
    %c0_271 = arith.constant 0 : index
    %427 = vector.load %arg8[%c0_270, %c0_271] : memref<18x18xf32, #tpu.memory_space<vmem>>, vector<16x16xf32>
    %428 = vector.broadcast %426 : f32 to vector<16x16xf32>
    %429 = arith.mulf %428, %427 : vector<16x16xf32>
    %c1_272 = arith.constant 1 : index
    %430 = memref.load %arg5[%c1_272] : memref<9xf32, #tpu.memory_space<smem>>
    %c0_273 = arith.constant 0 : index
    %c1_274 = arith.constant 1 : index
    %431 = vector.load %arg8[%c0_273, %c1_274] : memref<18x18xf32, #tpu.memory_space<vmem>>, vector<16x16xf32>
    %432 = vector.broadcast %430 : f32 to vector<16x16xf32>
    %433 = arith.mulf %432, %431 : vector<16x16xf32>
    %434 = arith.addf %429, %433 : vector<16x16xf32>
    %c2_275 = arith.constant 2 : index
    %435 = memref.load %arg5[%c2_275] : memref<9xf32, #tpu.memory_space<smem>>
    %c0_276 = arith.constant 0 : index
    %c2_277 = arith.constant 2 : index
    %436 = vector.load %arg8[%c0_276, %c2_277] : memref<18x18xf32, #tpu.memory_space<vmem>>, vector<16x16xf32>
    %437 = vector.broadcast %435 : f32 to vector<16x16xf32>
    %438 = arith.mulf %437, %436 : vector<16x16xf32>
    %439 = arith.addf %434, %438 : vector<16x16xf32>
    %c3_278 = arith.constant 3 : index
    %440 = memref.load %arg5[%c3_278] : memref<9xf32, #tpu.memory_space<smem>>
    %c1_279 = arith.constant 1 : index
    %c0_280 = arith.constant 0 : index
    %441 = vector.load %arg8[%c1_279, %c0_280] : memref<18x18xf32, #tpu.memory_space<vmem>>, vector<16x16xf32>
    %442 = vector.broadcast %440 : f32 to vector<16x16xf32>
    %443 = arith.mulf %442, %441 : vector<16x16xf32>
    %444 = arith.addf %439, %443 : vector<16x16xf32>
    %c4_281 = arith.constant 4 : index
    %445 = memref.load %arg5[%c4_281] : memref<9xf32, #tpu.memory_space<smem>>
    %c1_282 = arith.constant 1 : index
    %c1_283 = arith.constant 1 : index
    %446 = vector.load %arg8[%c1_282, %c1_283] : memref<18x18xf32, #tpu.memory_space<vmem>>, vector<16x16xf32>
    %447 = vector.broadcast %445 : f32 to vector<16x16xf32>
    %448 = arith.mulf %447, %446 : vector<16x16xf32>
    %449 = arith.addf %444, %448 : vector<16x16xf32>
    %c5_284 = arith.constant 5 : index
    %450 = memref.load %arg5[%c5_284] : memref<9xf32, #tpu.memory_space<smem>>
    %c1_285 = arith.constant 1 : index
    %c2_286 = arith.constant 2 : index
    %451 = vector.load %arg8[%c1_285, %c2_286] : memref<18x18xf32, #tpu.memory_space<vmem>>, vector<16x16xf32>
    %452 = vector.broadcast %450 : f32 to vector<16x16xf32>
    %453 = arith.mulf %452, %451 : vector<16x16xf32>
    %454 = arith.addf %449, %453 : vector<16x16xf32>
    %c6_287 = arith.constant 6 : index
    %455 = memref.load %arg5[%c6_287] : memref<9xf32, #tpu.memory_space<smem>>
    %c2_288 = arith.constant 2 : index
    %c0_289 = arith.constant 0 : index
    %456 = vector.load %arg8[%c2_288, %c0_289] : memref<18x18xf32, #tpu.memory_space<vmem>>, vector<16x16xf32>
    %457 = vector.broadcast %455 : f32 to vector<16x16xf32>
    %458 = arith.mulf %457, %456 : vector<16x16xf32>
    %459 = arith.addf %454, %458 : vector<16x16xf32>
    %c7_290 = arith.constant 7 : index
    %460 = memref.load %arg5[%c7_290] : memref<9xf32, #tpu.memory_space<smem>>
    %c2_291 = arith.constant 2 : index
    %c1_292 = arith.constant 1 : index
    %461 = vector.load %arg8[%c2_291, %c1_292] : memref<18x18xf32, #tpu.memory_space<vmem>>, vector<16x16xf32>
    %462 = vector.broadcast %460 : f32 to vector<16x16xf32>
    %463 = arith.mulf %462, %461 : vector<16x16xf32>
    %464 = arith.addf %459, %463 : vector<16x16xf32>
    %c8_293 = arith.constant 8 : index
    %465 = memref.load %arg5[%c8_293] : memref<9xf32, #tpu.memory_space<smem>>
    %c2_294 = arith.constant 2 : index
    %c2_295 = arith.constant 2 : index
    %466 = vector.load %arg8[%c2_294, %c2_295] : memref<18x18xf32, #tpu.memory_space<vmem>>, vector<16x16xf32>
    %467 = vector.broadcast %465 : f32 to vector<16x16xf32>
    %468 = arith.mulf %467, %466 : vector<16x16xf32>
    %469 = arith.addf %464, %468 : vector<16x16xf32>
    %c0_296 = arith.constant 0 : index
    %c6_297 = arith.constant 6 : index
    %c0_298 = arith.constant 0 : index
    %c0_299 = arith.constant 0 : index
    %470 = vector.load %arg6[%c0_296, %c6_297, %c0_298, %c0_299] : memref<1x10x16x16xf32, #tpu.memory_space<vmem>>, vector<1x1x16x16xf32>
    %471 = vector.shape_cast %470 : vector<1x1x16x16xf32> to vector<16x16xf32>
    %472 = vector.shape_cast %469 : vector<16x16xf32> to vector<1x1x16x16xf32>
    tpu.vector_store %arg6[%c0_296, %c6_297, %c0_298, %c0_299], %472 {strides = array<i32>} : memref<1x10x16x16xf32, #tpu.memory_space<vmem>>, vector<1x1x16x16xf32>,
    %c0_300 = arith.constant 0 : index
    %c0_301 = arith.constant 0 : index
    %473 = vector.load %arg7[%c0_300, %c0_301] : memref<18x18xf32, #tpu.memory_space<vmem>>, vector<18x18xf32>
    %c7_302 = arith.constant 7 : index
    %474 = memref.load %arg4[%c7_302] : memref<10xf32, #tpu.memory_space<smem>>
    %475 = vector.broadcast %474 : f32 to vector<18x18xf32>
    %476 = arith.mulf %473, %475 : vector<18x18xf32>
    %cst_303 = arith.constant 1.000000e+00 : f32
    %477 = vector.broadcast %cst_303 : f32 to vector<18x18xf32>
    %478 = arith.addf %477, %476 : vector<18x18xf32>
    %479 = tpu.reciprocal %478 {approx = true} : vector<18x18xf32> -> vector<18x18xf32>
    %480 = arith.mulf %479, %479 : vector<18x18xf32>
    %481 = arith.mulf %476, %480 : vector<18x18xf32>
    %c0_304 = arith.constant 0 : index
    %c0_305 = arith.constant 0 : index
    %482 = vector.load %arg8[%c0_304, %c0_305] : memref<18x18xf32, #tpu.memory_space<vmem>>, vector<18x18xf32>
    tpu.vector_store %arg8[%c0_304, %c0_305], %481 {strides = array<i32>} : memref<18x18xf32, #tpu.memory_space<vmem>>, vector<18x18xf32>,
    %c0_306 = arith.constant 0 : index
    %483 = memref.load %arg5[%c0_306] : memref<9xf32, #tpu.memory_space<smem>>
    %c0_307 = arith.constant 0 : index
    %c0_308 = arith.constant 0 : index
    %484 = vector.load %arg8[%c0_307, %c0_308] : memref<18x18xf32, #tpu.memory_space<vmem>>, vector<16x16xf32>
    %485 = vector.broadcast %483 : f32 to vector<16x16xf32>
    %486 = arith.mulf %485, %484 : vector<16x16xf32>
    %c1_309 = arith.constant 1 : index
    %487 = memref.load %arg5[%c1_309] : memref<9xf32, #tpu.memory_space<smem>>
    %c0_310 = arith.constant 0 : index
    %c1_311 = arith.constant 1 : index
    %488 = vector.load %arg8[%c0_310, %c1_311] : memref<18x18xf32, #tpu.memory_space<vmem>>, vector<16x16xf32>
    %489 = vector.broadcast %487 : f32 to vector<16x16xf32>
    %490 = arith.mulf %489, %488 : vector<16x16xf32>
    %491 = arith.addf %486, %490 : vector<16x16xf32>
    %c2_312 = arith.constant 2 : index
    %492 = memref.load %arg5[%c2_312] : memref<9xf32, #tpu.memory_space<smem>>
    %c0_313 = arith.constant 0 : index
    %c2_314 = arith.constant 2 : index
    %493 = vector.load %arg8[%c0_313, %c2_314] : memref<18x18xf32, #tpu.memory_space<vmem>>, vector<16x16xf32>
    %494 = vector.broadcast %492 : f32 to vector<16x16xf32>
    %495 = arith.mulf %494, %493 : vector<16x16xf32>
    %496 = arith.addf %491, %495 : vector<16x16xf32>
    %c3_315 = arith.constant 3 : index
    %497 = memref.load %arg5[%c3_315] : memref<9xf32, #tpu.memory_space<smem>>
    %c1_316 = arith.constant 1 : index
    %c0_317 = arith.constant 0 : index
    %498 = vector.load %arg8[%c1_316, %c0_317] : memref<18x18xf32, #tpu.memory_space<vmem>>, vector<16x16xf32>
    %499 = vector.broadcast %497 : f32 to vector<16x16xf32>
    %500 = arith.mulf %499, %498 : vector<16x16xf32>
    %501 = arith.addf %496, %500 : vector<16x16xf32>
    %c4_318 = arith.constant 4 : index
    %502 = memref.load %arg5[%c4_318] : memref<9xf32, #tpu.memory_space<smem>>
    %c1_319 = arith.constant 1 : index
    %c1_320 = arith.constant 1 : index
    %503 = vector.load %arg8[%c1_319, %c1_320] : memref<18x18xf32, #tpu.memory_space<vmem>>, vector<16x16xf32>
    %504 = vector.broadcast %502 : f32 to vector<16x16xf32>
    %505 = arith.mulf %504, %503 : vector<16x16xf32>
    %506 = arith.addf %501, %505 : vector<16x16xf32>
    %c5_321 = arith.constant 5 : index
    %507 = memref.load %arg5[%c5_321] : memref<9xf32, #tpu.memory_space<smem>>
    %c1_322 = arith.constant 1 : index
    %c2_323 = arith.constant 2 : index
    %508 = vector.load %arg8[%c1_322, %c2_323] : memref<18x18xf32, #tpu.memory_space<vmem>>, vector<16x16xf32>
    %509 = vector.broadcast %507 : f32 to vector<16x16xf32>
    %510 = arith.mulf %509, %508 : vector<16x16xf32>
    %511 = arith.addf %506, %510 : vector<16x16xf32>
    %c6_324 = arith.constant 6 : index
    %512 = memref.load %arg5[%c6_324] : memref<9xf32, #tpu.memory_space<smem>>
    %c2_325 = arith.constant 2 : index
    %c0_326 = arith.constant 0 : index
    %513 = vector.load %arg8[%c2_325, %c0_326] : memref<18x18xf32, #tpu.memory_space<vmem>>, vector<16x16xf32>
    %514 = vector.broadcast %512 : f32 to vector<16x16xf32>
    %515 = arith.mulf %514, %513 : vector<16x16xf32>
    %516 = arith.addf %511, %515 : vector<16x16xf32>
    %c7_327 = arith.constant 7 : index
    %517 = memref.load %arg5[%c7_327] : memref<9xf32, #tpu.memory_space<smem>>
    %c2_328 = arith.constant 2 : index
    %c1_329 = arith.constant 1 : index
    %518 = vector.load %arg8[%c2_328, %c1_329] : memref<18x18xf32, #tpu.memory_space<vmem>>, vector<16x16xf32>
    %519 = vector.broadcast %517 : f32 to vector<16x16xf32>
    %520 = arith.mulf %519, %518 : vector<16x16xf32>
    %521 = arith.addf %516, %520 : vector<16x16xf32>
    %c8_330 = arith.constant 8 : index
    %522 = memref.load %arg5[%c8_330] : memref<9xf32, #tpu.memory_space<smem>>
    %c2_331 = arith.constant 2 : index
    %c2_332 = arith.constant 2 : index
    %523 = vector.load %arg8[%c2_331, %c2_332] : memref<18x18xf32, #tpu.memory_space<vmem>>, vector<16x16xf32>
    %524 = vector.broadcast %522 : f32 to vector<16x16xf32>
    %525 = arith.mulf %524, %523 : vector<16x16xf32>
    %526 = arith.addf %521, %525 : vector<16x16xf32>
    %c0_333 = arith.constant 0 : index
    %c7_334 = arith.constant 7 : index
    %c0_335 = arith.constant 0 : index
    %c0_336 = arith.constant 0 : index
    %527 = vector.load %arg6[%c0_333, %c7_334, %c0_335, %c0_336] : memref<1x10x16x16xf32, #tpu.memory_space<vmem>>, vector<1x1x16x16xf32>
    %528 = vector.shape_cast %527 : vector<1x1x16x16xf32> to vector<16x16xf32>
    %529 = vector.shape_cast %526 : vector<16x16xf32> to vector<1x1x16x16xf32>
    tpu.vector_store %arg6[%c0_333, %c7_334, %c0_335, %c0_336], %529 {strides = array<i32>} : memref<1x10x16x16xf32, #tpu.memory_space<vmem>>, vector<1x1x16x16xf32>,
    %c0_337 = arith.constant 0 : index
    %c0_338 = arith.constant 0 : index
    %530 = vector.load %arg7[%c0_337, %c0_338] : memref<18x18xf32, #tpu.memory_space<vmem>>, vector<18x18xf32>
    %c8_339 = arith.constant 8 : index
    %531 = memref.load %arg4[%c8_339] : memref<10xf32, #tpu.memory_space<smem>>
    %532 = vector.broadcast %531 : f32 to vector<18x18xf32>
    %533 = arith.mulf %530, %532 : vector<18x18xf32>
    %cst_340 = arith.constant 1.000000e+00 : f32
    %534 = vector.broadcast %cst_340 : f32 to vector<18x18xf32>
    %535 = arith.addf %534, %533 : vector<18x18xf32>
    %536 = tpu.reciprocal %535 {approx = true} : vector<18x18xf32> -> vector<18x18xf32>
    %537 = arith.mulf %536, %536 : vector<18x18xf32>
    %538 = arith.mulf %533, %537 : vector<18x18xf32>
    %c0_341 = arith.constant 0 : index
    %c0_342 = arith.constant 0 : index
    %539 = vector.load %arg8[%c0_341, %c0_342] : memref<18x18xf32, #tpu.memory_space<vmem>>, vector<18x18xf32>
    tpu.vector_store %arg8[%c0_341, %c0_342], %538 {strides = array<i32>} : memref<18x18xf32, #tpu.memory_space<vmem>>, vector<18x18xf32>,
    %c0_343 = arith.constant 0 : index
    %540 = memref.load %arg5[%c0_343] : memref<9xf32, #tpu.memory_space<smem>>
    %c0_344 = arith.constant 0 : index
    %c0_345 = arith.constant 0 : index
    %541 = vector.load %arg8[%c0_344, %c0_345] : memref<18x18xf32, #tpu.memory_space<vmem>>, vector<16x16xf32>
    %542 = vector.broadcast %540 : f32 to vector<16x16xf32>
    %543 = arith.mulf %542, %541 : vector<16x16xf32>
    %c1_346 = arith.constant 1 : index
    %544 = memref.load %arg5[%c1_346] : memref<9xf32, #tpu.memory_space<smem>>
    %c0_347 = arith.constant 0 : index
    %c1_348 = arith.constant 1 : index
    %545 = vector.load %arg8[%c0_347, %c1_348] : memref<18x18xf32, #tpu.memory_space<vmem>>, vector<16x16xf32>
    %546 = vector.broadcast %544 : f32 to vector<16x16xf32>
    %547 = arith.mulf %546, %545 : vector<16x16xf32>
    %548 = arith.addf %543, %547 : vector<16x16xf32>
    %c2_349 = arith.constant 2 : index
    %549 = memref.load %arg5[%c2_349] : memref<9xf32, #tpu.memory_space<smem>>
    %c0_350 = arith.constant 0 : index
    %c2_351 = arith.constant 2 : index
    %550 = vector.load %arg8[%c0_350, %c2_351] : memref<18x18xf32, #tpu.memory_space<vmem>>, vector<16x16xf32>
    %551 = vector.broadcast %549 : f32 to vector<16x16xf32>
    %552 = arith.mulf %551, %550 : vector<16x16xf32>
    %553 = arith.addf %548, %552 : vector<16x16xf32>
    %c3_352 = arith.constant 3 : index
    %554 = memref.load %arg5[%c3_352] : memref<9xf32, #tpu.memory_space<smem>>
    %c1_353 = arith.constant 1 : index
    %c0_354 = arith.constant 0 : index
    %555 = vector.load %arg8[%c1_353, %c0_354] : memref<18x18xf32, #tpu.memory_space<vmem>>, vector<16x16xf32>
    %556 = vector.broadcast %554 : f32 to vector<16x16xf32>
    %557 = arith.mulf %556, %555 : vector<16x16xf32>
    %558 = arith.addf %553, %557 : vector<16x16xf32>
    %c4_355 = arith.constant 4 : index
    %559 = memref.load %arg5[%c4_355] : memref<9xf32, #tpu.memory_space<smem>>
    %c1_356 = arith.constant 1 : index
    %c1_357 = arith.constant 1 : index
    %560 = vector.load %arg8[%c1_356, %c1_357] : memref<18x18xf32, #tpu.memory_space<vmem>>, vector<16x16xf32>
    %561 = vector.broadcast %559 : f32 to vector<16x16xf32>
    %562 = arith.mulf %561, %560 : vector<16x16xf32>
    %563 = arith.addf %558, %562 : vector<16x16xf32>
    %c5_358 = arith.constant 5 : index
    %564 = memref.load %arg5[%c5_358] : memref<9xf32, #tpu.memory_space<smem>>
    %c1_359 = arith.constant 1 : index
    %c2_360 = arith.constant 2 : index
    %565 = vector.load %arg8[%c1_359, %c2_360] : memref<18x18xf32, #tpu.memory_space<vmem>>, vector<16x16xf32>
    %566 = vector.broadcast %564 : f32 to vector<16x16xf32>
    %567 = arith.mulf %566, %565 : vector<16x16xf32>
    %568 = arith.addf %563, %567 : vector<16x16xf32>
    %c6_361 = arith.constant 6 : index
    %569 = memref.load %arg5[%c6_361] : memref<9xf32, #tpu.memory_space<smem>>
    %c2_362 = arith.constant 2 : index
    %c0_363 = arith.constant 0 : index
    %570 = vector.load %arg8[%c2_362, %c0_363] : memref<18x18xf32, #tpu.memory_space<vmem>>, vector<16x16xf32>
    %571 = vector.broadcast %569 : f32 to vector<16x16xf32>
    %572 = arith.mulf %571, %570 : vector<16x16xf32>
    %573 = arith.addf %568, %572 : vector<16x16xf32>
    %c7_364 = arith.constant 7 : index
    %574 = memref.load %arg5[%c7_364] : memref<9xf32, #tpu.memory_space<smem>>
    %c2_365 = arith.constant 2 : index
    %c1_366 = arith.constant 1 : index
    %575 = vector.load %arg8[%c2_365, %c1_366] : memref<18x18xf32, #tpu.memory_space<vmem>>, vector<16x16xf32>
    %576 = vector.broadcast %574 : f32 to vector<16x16xf32>
    %577 = arith.mulf %576, %575 : vector<16x16xf32>
    %578 = arith.addf %573, %577 : vector<16x16xf32>
    %c8_367 = arith.constant 8 : index
    %579 = memref.load %arg5[%c8_367] : memref<9xf32, #tpu.memory_space<smem>>
    %c2_368 = arith.constant 2 : index
    %c2_369 = arith.constant 2 : index
    %580 = vector.load %arg8[%c2_368, %c2_369] : memref<18x18xf32, #tpu.memory_space<vmem>>, vector<16x16xf32>
    %581 = vector.broadcast %579 : f32 to vector<16x16xf32>
    %582 = arith.mulf %581, %580 : vector<16x16xf32>
    %583 = arith.addf %578, %582 : vector<16x16xf32>
    %c0_370 = arith.constant 0 : index
    %c8_371 = arith.constant 8 : index
    %c0_372 = arith.constant 0 : index
    %c0_373 = arith.constant 0 : index
    %584 = vector.load %arg6[%c0_370, %c8_371, %c0_372, %c0_373] : memref<1x10x16x16xf32, #tpu.memory_space<vmem>>, vector<1x1x16x16xf32>
    %585 = vector.shape_cast %584 : vector<1x1x16x16xf32> to vector<16x16xf32>
    %586 = vector.shape_cast %583 : vector<16x16xf32> to vector<1x1x16x16xf32>
    tpu.vector_store %arg6[%c0_370, %c8_371, %c0_372, %c0_373], %586 {strides = array<i32>} : memref<1x10x16x16xf32, #tpu.memory_space<vmem>>, vector<1x1x16x16xf32>,
    %c0_374 = arith.constant 0 : index
    %c0_375 = arith.constant 0 : index
    %587 = vector.load %arg7[%c0_374, %c0_375] : memref<18x18xf32, #tpu.memory_space<vmem>>, vector<18x18xf32>
    %c9 = arith.constant 9 : index
    %588 = memref.load %arg4[%c9] : memref<10xf32, #tpu.memory_space<smem>>
    %589 = vector.broadcast %588 : f32 to vector<18x18xf32>
    %590 = arith.mulf %587, %589 : vector<18x18xf32>
    %cst_376 = arith.constant 1.000000e+00 : f32
    %591 = vector.broadcast %cst_376 : f32 to vector<18x18xf32>
    %592 = arith.addf %591, %590 : vector<18x18xf32>
    %593 = tpu.reciprocal %592 {approx = true} : vector<18x18xf32> -> vector<18x18xf32>
    %594 = arith.mulf %593, %593 : vector<18x18xf32>
    %595 = arith.mulf %590, %594 : vector<18x18xf32>
    %c0_377 = arith.constant 0 : index
    %c0_378 = arith.constant 0 : index
    %596 = vector.load %arg8[%c0_377, %c0_378] : memref<18x18xf32, #tpu.memory_space<vmem>>, vector<18x18xf32>
    tpu.vector_store %arg8[%c0_377, %c0_378], %595 {strides = array<i32>} : memref<18x18xf32, #tpu.memory_space<vmem>>, vector<18x18xf32>,
    %c0_379 = arith.constant 0 : index
    %597 = memref.load %arg5[%c0_379] : memref<9xf32, #tpu.memory_space<smem>>
    %c0_380 = arith.constant 0 : index
    %c0_381 = arith.constant 0 : index
    %598 = vector.load %arg8[%c0_380, %c0_381] : memref<18x18xf32, #tpu.memory_space<vmem>>, vector<16x16xf32>
    %599 = vector.broadcast %597 : f32 to vector<16x16xf32>
    %600 = arith.mulf %599, %598 : vector<16x16xf32>
    %c1_382 = arith.constant 1 : index
    %601 = memref.load %arg5[%c1_382] : memref<9xf32, #tpu.memory_space<smem>>
    %c0_383 = arith.constant 0 : index
    %c1_384 = arith.constant 1 : index
    %602 = vector.load %arg8[%c0_383, %c1_384] : memref<18x18xf32, #tpu.memory_space<vmem>>, vector<16x16xf32>
    %603 = vector.broadcast %601 : f32 to vector<16x16xf32>
    %604 = arith.mulf %603, %602 : vector<16x16xf32>
    %605 = arith.addf %600, %604 : vector<16x16xf32>
    %c2_385 = arith.constant 2 : index
    %606 = memref.load %arg5[%c2_385] : memref<9xf32, #tpu.memory_space<smem>>
    %c0_386 = arith.constant 0 : index
    %c2_387 = arith.constant 2 : index
    %607 = vector.load %arg8[%c0_386, %c2_387] : memref<18x18xf32, #tpu.memory_space<vmem>>, vector<16x16xf32>
    %608 = vector.broadcast %606 : f32 to vector<16x16xf32>
    %609 = arith.mulf %608, %607 : vector<16x16xf32>
    %610 = arith.addf %605, %609 : vector<16x16xf32>
    %c3_388 = arith.constant 3 : index
    %611 = memref.load %arg5[%c3_388] : memref<9xf32, #tpu.memory_space<smem>>
    %c1_389 = arith.constant 1 : index
    %c0_390 = arith.constant 0 : index
    %612 = vector.load %arg8[%c1_389, %c0_390] : memref<18x18xf32, #tpu.memory_space<vmem>>, vector<16x16xf32>
    %613 = vector.broadcast %611 : f32 to vector<16x16xf32>
    %614 = arith.mulf %613, %612 : vector<16x16xf32>
    %615 = arith.addf %610, %614 : vector<16x16xf32>
    %c4_391 = arith.constant 4 : index
    %616 = memref.load %arg5[%c4_391] : memref<9xf32, #tpu.memory_space<smem>>
    %c1_392 = arith.constant 1 : index
    %c1_393 = arith.constant 1 : index
    %617 = vector.load %arg8[%c1_392, %c1_393] : memref<18x18xf32, #tpu.memory_space<vmem>>, vector<16x16xf32>
    %618 = vector.broadcast %616 : f32 to vector<16x16xf32>
    %619 = arith.mulf %618, %617 : vector<16x16xf32>
    %620 = arith.addf %615, %619 : vector<16x16xf32>
    %c5_394 = arith.constant 5 : index
    %621 = memref.load %arg5[%c5_394] : memref<9xf32, #tpu.memory_space<smem>>
    %c1_395 = arith.constant 1 : index
    %c2_396 = arith.constant 2 : index
    %622 = vector.load %arg8[%c1_395, %c2_396] : memref<18x18xf32, #tpu.memory_space<vmem>>, vector<16x16xf32>
    %623 = vector.broadcast %621 : f32 to vector<16x16xf32>
    %624 = arith.mulf %623, %622 : vector<16x16xf32>
    %625 = arith.addf %620, %624 : vector<16x16xf32>
    %c6_397 = arith.constant 6 : index
    %626 = memref.load %arg5[%c6_397] : memref<9xf32, #tpu.memory_space<smem>>
    %c2_398 = arith.constant 2 : index
    %c0_399 = arith.constant 0 : index
    %627 = vector.load %arg8[%c2_398, %c0_399] : memref<18x18xf32, #tpu.memory_space<vmem>>, vector<16x16xf32>
    %628 = vector.broadcast %626 : f32 to vector<16x16xf32>
    %629 = arith.mulf %628, %627 : vector<16x16xf32>
    %630 = arith.addf %625, %629 : vector<16x16xf32>
    %c7_400 = arith.constant 7 : index
    %631 = memref.load %arg5[%c7_400] : memref<9xf32, #tpu.memory_space<smem>>
    %c2_401 = arith.constant 2 : index
    %c1_402 = arith.constant 1 : index
    %632 = vector.load %arg8[%c2_401, %c1_402] : memref<18x18xf32, #tpu.memory_space<vmem>>, vector<16x16xf32>
    %633 = vector.broadcast %631 : f32 to vector<16x16xf32>
    %634 = arith.mulf %633, %632 : vector<16x16xf32>
    %635 = arith.addf %630, %634 : vector<16x16xf32>
    %c8_403 = arith.constant 8 : index
    %636 = memref.load %arg5[%c8_403] : memref<9xf32, #tpu.memory_space<smem>>
    %c2_404 = arith.constant 2 : index
    %c2_405 = arith.constant 2 : index
    %637 = vector.load %arg8[%c2_404, %c2_405] : memref<18x18xf32, #tpu.memory_space<vmem>>, vector<16x16xf32>
    %638 = vector.broadcast %636 : f32 to vector<16x16xf32>
    %639 = arith.mulf %638, %637 : vector<16x16xf32>
    %640 = arith.addf %635, %639 : vector<16x16xf32>
    %c0_406 = arith.constant 0 : index
    %c9_407 = arith.constant 9 : index
    %c0_408 = arith.constant 0 : index
    %c0_409 = arith.constant 0 : index
    %641 = vector.load %arg6[%c0_406, %c9_407, %c0_408, %c0_409] : memref<1x10x16x16xf32, #tpu.memory_space<vmem>>, vector<1x1x16x16xf32>
    %642 = vector.shape_cast %641 : vector<1x1x16x16xf32> to vector<16x16xf32>
    %643 = vector.shape_cast %640 : vector<16x16xf32> to vector<1x1x16x16xf32>
    tpu.vector_store %arg6[%c0_406, %c9_407, %c0_408, %c0_409], %643 {strides = array<i32>} : memref<1x10x16x16xf32, #tpu.memory_space<vmem>>, vector<1x1x16x16xf32>,
    return
  }
  func.func @transform_0(%arg0: i32, %arg1: i32) -> (i32, i32, i32, i32) {
    %c0_i32 = arith.constant 0 : i32
    %c0_i32_0 = arith.constant 0 : i32
    %c0_i32_1 = arith.constant 0 : i32
    return %arg0, %arg1, %c0_i32, %c0_i32_0 : i32, i32, i32, i32
  }
  func.func @transform_1(%arg0: i32, %arg1: i32) -> i32 {
    %c0_i32 = arith.constant 0 : i32
    %c0_i32_0 = arith.constant 0 : i32
    return %c0_i32 : i32
  }
  func.func @transform_2(%arg0: i32, %arg1: i32) -> i32 {
    %c0_i32 = arith.constant 0 : i32
    %c0_i32_0 = arith.constant 0 : i32
    return %c0_i32 : i32
  }
  func.func @transform_3(%arg0: i32, %arg1: i32) -> i32 {
    %c0_i32 = arith.constant 0 : i32
    %c0_i32_0 = arith.constant 0 : i32
    return %c0_i32 : i32
  }
  func.func @transform_4(%arg0: i32, %arg1: i32) -> (i32, i32, i32, i32) {
    %c0_i32 = arith.constant 0 : i32
    %c0_i32_0 = arith.constant 0 : i32
    %c0_i32_1 = arith.constant 0 : i32
    return %arg0, %c0_i32, %arg1, %c0_i32_0 : i32, i32, i32, i32
  }
}

</mosaic_0001>

<llo_original>
// kernel: hist_forward.1
$region0: #{hist_forward.1}
  #allocation0 [shape = 'u32[]', space=smem, size = 0x4, offset = 0x4, fixed_abs, tag = 'smem constant byte address 0x4 - core index']
  #allocation1 [shape = 'u32[144,128]{1,0:T(1,128)}', space=vmem, size = 0x12000, scoped, tag = 'internal scratch']
  #allocation2 [shape = 'f32[18,18]{1,0:T(8,128)}', space=vmem, size = 0x3000, scoped, tag = 'scratch operand']
  #allocation3 [shape = 'f32[18,18]{1,0:T(8,128)}', space=vmem, size = 0x3000, scoped, tag = 'scratch operand']
  %s0 = inlined_call_operand.vmem [shape: f32[2,1,20,20], index: 0, kind: input, shape index: {}]
  %s1 = inlined_call_operand.vmem [shape: f32[9], index: 1, kind: input, shape index: {}]
  %s2 = inlined_call_operand.vmem [shape: f32[10], index: 2, kind: input, shape index: {}]
  %s3 = inlined_call_operand.vmem [shape: f32[9], index: 3, kind: input, shape index: {}]
  %s4 = inlined_call_operand.hbm [shape: f32[2,10,16,16], index: 4, kind: output, shape index: {}]
  %s5 = sld [smem:[#allocation0]]
  $region61: #{hist_forward.1} parent=0
    _
  %s7 = ssub.s32 1, %s5
  %s8 = scalar_select 0, %s7, %s5
  $region1: #{hist_forward.1} parent=0
    #allocation4 [shape = 'u8[512]{0}', space=smem, size = 0x200, scoped, tag = 'input window, operand 1, single buffered']
    #allocation5 [shape = 's32[2]{0}', space=sflag, size = 0x8, scoped, tag = 'scoped memory for hist_forward.1']
    #allocation6 [shape = 's32[2]{0}', space=sflag, size = 0x8, scoped, tag = 'scoped memory for hist_forward.1']
    #allocation7 [shape = 'u8[512]{0}', space=smem, size = 0x200, scoped, tag = 'input window, operand 2, single buffered']
    #allocation8 [shape = 's32[1]{0}', space=sflag, size = 0x4, scoped, tag = 'scoped memory for hist_forward.1']
    #allocation9 [shape = 'u8[512]{0}', space=smem, size = 0x200, scoped, tag = 'input window, operand 3, single buffered']
    #allocation10 [shape = 'u8[163840]{0}', space=vmem, size = 0x28000, scoped, tag = 'output window, operand 0']
    %9 = vsyncpa [#allocation6], 0
    %10 = vsyncpa [#allocation8], 0
    %11 = vsyncpa [#allocation5], 0
    %s12 = scalar_lea.sflag [#allocation5], 1
    %13 = vsyncpa %s12, 0
    loop: start=0, step=1, limit=4
    $region2: #{hist_forward.1} parent=1 // loop_pre_header
      _
    $region3: #{hist_forward.1} parent=1 // loop_header
      %s15 = sphi 0, %s19
      %p16 = scmp.ge.s32.totalorder %s15, 4
      %s22 = sphi 0, %s34
      %s23 = sphi 0, %s30
      %s24 = sphi 0, %s22
      %s25 = sphi 0, %s23
      %s26 = sphi 0, %s24
      %s27 = sphi 0, %s25
      %s39 = sphi 0, %s41
      %s42 = sphi 0, %s39
      %s43 = sphi 0, %s42
      %s59 = sphi 0, %s43
      %s63 = sphi 0, %s63
      %s65 = sphi 0, %s63
      %s66 = sphi 0, %s65
      %s80 = sphi 0, %s66
      %s84 = sphi 0, %s84
      %s86 = sphi 0, %s84
      %s87 = sphi 0, %s86
      %s101 = sphi 0, %s87
      %s105 = sphi 0, %s105
      %s107 = sphi 0, %s105
      %s108 = sphi 0, %s107
      %s122 = sphi 0, %s108
      %s130 = sphi 0, %s132
      %s133 = sphi 0, %s130
      %s134 = sphi 0, %s133
      %s150 = sphi 0, %s134
    $region4: #{hist_forward.1} parent=1 // loop_header_branch
      %18 = sbr.rel (%p16) target = $region8
    $region5: #{hist_forward.1} parent=1 // loop_body
      %s20 = ssub.s32 %s15, 1
      %s21 = ssub.s32 %s15, 2
      %s28 = sadd.s32 1, %s23
      %p29 = scmp.ge.s32.totalorder %s28, 1
      %s30 = scalar_select %p29, 0, %s28
      %s31 = sadd.s32 1, %s22
      %s32 = scalar_select %p29, %s31, %s22
      %p33 = scmp.ge.s32.totalorder %s32, 2
      %s34 = scalar_select %p33, 0, %s32
      %s35 = ssub.s32 %s22, %s34
      %s36 = ssub.s32 %s23, %s30
      %s37 = sor.u32 %s35, %s36
      %p38 = scmp.eq.s32.totalorder %s37, 0
      %s40 = sadd.s32 %s39, 1
      %s41 = scalar_select %p38, %s39, %s40
      %p44 = pneg %p38
      %p45 = scmp.eq.s32.totalorder %s15, 1
      %p46 = por %p44, %p45
      %p47 = scmp.ne.s32.totalorder %s39, %s42
      %p48 = scmp.eq.s32.totalorder %s15, 0
      %p49 = por %p47, %p48
      %p50 = scmp.ne.s32.totalorder %s39, %s42
      %p51 = scmp.eq.s32.totalorder %s20, 1
      %p52 = por %p50, %p51
      %p53 = scmp.ne.s32.totalorder %s42, %s43
      %p54 = scmp.eq.s32.totalorder %s20, 0
      %p55 = por %p53, %p54
      %p56 = scmp.ne.s32.totalorder %s42, %s43
      %p57 = scmp.eq.s32.totalorder %s21, 1
      %p58 = por %p56, %p57
      %p60 = scmp.ne.s32.totalorder %s43, %s59
      %p61 = scmp.eq.s32.totalorder %s21, 0
      %p62 = por %p60, %p61
      %s64 = sadd.s32 %s63, 1
      %p67 = scmp.eq.s32.totalorder %s15, 1
      %p68 = scmp.ne.s32.totalorder %s63, %s65
      %p69 = scmp.eq.s32.totalorder %s15, 0
      %p70 = por %p68, %p69
      %p71 = scmp.ne.s32.totalorder %s63, %s65
      %p72 = scmp.eq.s32.totalorder %s20, 1
      %p73 = por %p71, %p72
      %p74 = scmp.ne.s32.totalorder %s65, %s66
      %p75 = scmp.eq.s32.totalorder %s20, 0
      %p76 = por %p74, %p75
      %p77 = scmp.ne.s32.totalorder %s65, %s66
      %p78 = scmp.eq.s32.totalorder %s21, 1
      %p79 = por %p77, %p78
      %p81 = scmp.ne.s32.totalorder %s66, %s80
      %p82 = scmp.eq.s32.totalorder %s21, 0
      %p83 = por %p81, %p82
      %s85 = sadd.s32 %s84, 1
      %p88 = scmp.eq.s32.totalorder %s15, 1
      %p89 = scmp.ne.s32.totalorder %s84, %s86
      %p90 = scmp.eq.s32.totalorder %s15, 0
      %p91 = por %p89, %p90
      %p92 = scmp.ne.s32.totalorder %s84, %s86
      %p93 = scmp.eq.s32.totalorder %s20, 1
      %p94 = por %p92, %p93
      %p95 = scmp.ne.s32.totalorder %s86, %s87
      %p96 = scmp.eq.s32.totalorder %s20, 0
      %p97 = por %p95, %p96
      %p98 = scmp.ne.s32.totalorder %s86, %s87
      %p99 = scmp.eq.s32.totalorder %s21, 1
      %p100 = por %p98, %p99
      %p102 = scmp.ne.s32.totalorder %s87, %s101
      %p103 = scmp.eq.s32.totalorder %s21, 0
      %p104 = por %p102, %p103
      %s106 = sadd.s32 %s105, 1
      %p109 = scmp.eq.s32.totalorder %s15, 1
      %p110 = scmp.ne.s32.totalorder %s105, %s107
      %p111 = scmp.eq.s32.totalorder %s15, 0
      %p112 = por %p110, %p111
      %p113 = scmp.ne.s32.totalorder %s105, %s107
      %p114 = scmp.eq.s32.totalorder %s20, 1
      %p115 = por %p113, %p114
      %p116 = scmp.ne.s32.totalorder %s107, %s108
      %p117 = scmp.eq.s32.totalorder %s20, 0
      %p118 = por %p116, %p117
      %p119 = scmp.ne.s32.totalorder %s107, %s108
      %p120 = scmp.eq.s32.totalorder %s21, 1
      %p121 = por %p119, %p120
      %p123 = scmp.ne.s32.totalorder %s108, %s122
      %p124 = scmp.eq.s32.totalorder %s21, 0
      %p125 = por %p123, %p124
      %s126 = ssub.s32 %s22, %s34
      %s127 = ssub.s32 %s23, %s30
      %s128 = sor.u32 %s126, %s127
      %p129 = scmp.eq.s32.totalorder %s128, 0
      %s131 = sadd.s32 %s130, 1
      %s132 = scalar_select %p129, %s130, %s131
      %p135 = pneg %p129
      %p136 = scmp.eq.s32.totalorder %s15, 1
      %p137 = por %p135, %p136
      %p138 = scmp.ne.s32.totalorder %s130, %s133
      %p139 = scmp.eq.s32.totalorder %s15, 0
      %p140 = por %p138, %p139
      %p141 = scmp.ne.s32.totalorder %s130, %s133
      %p142 = scmp.eq.s32.totalorder %s20, 1
      %p143 = por %p141, %p142
      %p144 = scmp.ne.s32.totalorder %s133, %s134
      %p145 = scmp.eq.s32.totalorder %s20, 0
      %p146 = por %p144, %p145
      %p147 = scmp.ne.s32.totalorder %s133, %s134
      %p148 = scmp.eq.s32.totalorder %s21, 1
      %p149 = por %p147, %p148
      %p151 = scmp.ne.s32.totalorder %s134, %s150
      %p152 = scmp.eq.s32.totalorder %s21, 0
      %p153 = por %p151, %p152
      %p154 = scmp.le.s32.totalorder 1, %s15
      %p155 = scmp.lt.s32.totalorder %s15, 3
      %p156 = pnand %p154, %p155
      %p157 = pneg %p156
      // Predicated region
      $region9: #{hist_forward.1} parent=5 // pred_check
        _
      $region10: #{hist_forward.1} parent=5 // pred_check_branch
        %159 = sbr.rel (%p156) target = $region12
      $region11: #{hist_forward.1} parent=5 // pred_region
        %s160 = ssub.s32 %s15, 1
        // Predicated region
        $region13: #{hist_forward.1} parent=11 // pred_check
          %p161 = pneg %p76
        $region14: #{hist_forward.1} parent=11 // pred_check_branch
          %163 = sbr.rel (%p161) target = $region16
        $region15: #{hist_forward.1} parent=11 // pred_region
          %s165 = ssub.s32 16, 16
          %166 = vsyncadd [#allocation6], %s165
          %s168 = sshll.u32 %s1, 4
          %s169 = int_to_ptr.vmem [resolvable:$true] %s168
          %171 = dma.vmem_to_smem %s169, 16, [#allocation4], [#allocation6]
        $region16: #{hist_forward.1} parent=11 // pred_fallthru
          _
        // Predicated region
        $region17: #{hist_forward.1} parent=11 // pred_check
          %p172 = pneg %p97
        $region18: #{hist_forward.1} parent=11 // pred_check_branch
          %174 = sbr.rel (%p172) target = $region20
        $region19: #{hist_forward.1} parent=11 // pred_region
          %s176 = ssub.s32 16, 16
          %177 = vsyncadd [#allocation8], %s176
          %s179 = sshll.u32 %s2, 4
          %s180 = int_to_ptr.vmem [resolvable:$true] %s179
          %182 = dma.vmem_to_smem %s180, 16, [#allocation7], [#allocation8]
        $region20: #{hist_forward.1} parent=11 // pred_fallthru
          _
        // Predicated region
        $region21: #{hist_forward.1} parent=11 // pred_check
          %p183 = pneg %p118
        $region22: #{hist_forward.1} parent=11 // pred_check_branch
          %185 = sbr.rel (%p183) target = $region24
        $region23: #{hist_forward.1} parent=11 // pred_region
          %s187 = ssub.s32 16, 16
          %188 = vsyncadd [#allocation8], %s187
          %s190 = sshll.u32 %s3, 4
          %s191 = int_to_ptr.vmem [resolvable:$true] %s190
          %193 = dma.vmem_to_smem %s191, 16, [#allocation9], [#allocation8]
        $region24: #{hist_forward.1} parent=11 // pred_fallthru
          _
      $region12: #{hist_forward.1} parent=5 // pred_fallthru
        _
      %p194 = scmp.lt.s32.totalorder %s15, 2
      // Predicated region
      $region25: #{hist_forward.1} parent=5 // pred_check
        %p195 = pneg %p194
      $region26: #{hist_forward.1} parent=5 // pred_check_branch
        %197 = sbr.rel (%p195) target = $region28
      $region27: #{hist_forward.1} parent=5 // pred_region
        // Predicated region
        $region29: #{hist_forward.1} parent=27 // pred_check
          %p198 = pneg %p49
        $region30: #{hist_forward.1} parent=27 // pred_check_branch
          %200 = sbr.rel (%p198) target = $region32
        $region31: #{hist_forward.1} parent=27 // pred_region
          %p201 = scmp.lt.s32.totalorder %s22, 1
          %s202 = scalar_select %p201, %s22, 1
          %p203 = scmp.lt.s32.totalorder %s23, 0
          %s204 = scalar_select %p203, %s23, 0
          %s205 = smul.addr %s204, 3
          %s206 = smul.addr %s202, 3
          %s207 = sadd.s32 %s205, %s206
          %s208 = smul.addr %s207, 8
          %s209 = scalar_lea.vmem %s0, %s208
        $region32: #{hist_forward.1} parent=27 // pred_fallthru
          _
      $region28: #{hist_forward.1} parent=5 // pred_fallthru
        _
      %p210 = scmp.le.s32.totalorder 1, %s15
      %p211 = scmp.lt.s32.totalorder %s15, 3
      %p212 = pnand %p210, %p211
      %p213 = pneg %p212
      // Predicated region
      $region33: #{hist_forward.1} parent=5 // pred_check
        _
      $region34: #{hist_forward.1} parent=5 // pred_check_branch
        %215 = sbr.rel (%p212) target = $region36
      $region35: #{hist_forward.1} parent=5 // pred_region
        %s216 = ssub.s32 %s15, 1
        // Predicated region
        $region37: #{hist_forward.1} parent=35 // pred_check
          %p217 = pneg %p76
        $region38: #{hist_forward.1} parent=35 // pred_check_branch
          %219 = sbr.rel (%p217) target = $region40
        $region39: #{hist_forward.1} parent=35 // pred_region
          %220 = dma.done [#allocation6], 16
        $region40: #{hist_forward.1} parent=35 // pred_fallthru
          _
        // Predicated region
        $region41: #{hist_forward.1} parent=35 // pred_check
          %p221 = pneg %p97
        $region42: #{hist_forward.1} parent=35 // pred_check_branch
          %223 = sbr.rel (%p221) target = $region44
        $region43: #{hist_forward.1} parent=35 // pred_region
          %224 = dma.done [#allocation8], 16
        $region44: #{hist_forward.1} parent=35 // pred_fallthru
          _
        // Predicated region
        $region45: #{hist_forward.1} parent=35 // pred_check
          %p225 = pneg %p118
        $region46: #{hist_forward.1} parent=35 // pred_check_branch
          %227 = sbr.rel (%p225) target = $region48
        $region47: #{hist_forward.1} parent=35 // pred_region
          %228 = dma.done [#allocation8], 16
        $region48: #{hist_forward.1} parent=35 // pred_fallthru
          _
        %229 = sfence
        %p230 = scmp.lt.s32.totalorder %s24, 1
        %s231 = scalar_select %p230, %s24, 1
        %p232 = scmp.lt.s32.totalorder %s25, 0
        %s233 = scalar_select %p232, %s25, 0
        %s234 = smul.addr %s233, 3
        %s235 = smul.addr %s231, 3
        %s236 = sadd.s32 %s234, %s235
        %s237 = smul.addr %s236, 8
        %s238 = scalar_lea.vmem %s0, %s237
        %p239 = pneg %p55
        %p240 = pneg %p52
        %p241 = pneg %p76
        %p242 = pneg %p73
        %p243 = pneg %p97
        %p244 = pneg %p94
        %p245 = pneg %p118
        %p246 = pneg %p115
        %p247 = pneg %p146
        %p248 = pneg %p143
        %s249 = sand.u32 %s133, 1
        %s250 = scalar_lea.sflag [#allocation5], %s249
        %s251 = sand.u32 %s133, 1
        %s252 = smul.addr %s251, 160
        %s253 = scalar_lea.vmem [#allocation10], %s252
        %p254 = scmp.lt.s32.totalorder %s24, 1
        %s255 = scalar_select %p254, %s24, 1
        %p256 = scmp.lt.s32.totalorder %s25, 0
        %s257 = scalar_select %p256, %s25, 0
        %s258 = smul.addr %s257, 3
        %s259 = smul.addr %s255, 3
        %s260 = sadd.s32 %s258, %s259
        %s261 = smul.addr %s260, 8
        %s262 = scalar_lea.vmem %s0, %s261
        %s263 = smul.u32 2, %s25
        %s264 = smul.u32 %s25, 16
        %s265 = sld [smem:[#allocation4]]
        %v266 = vld [vmem:[%s262] sm:$0xff]
        %v267 = vld [vmem:[%s262 + $0x8] sm:$0xff]
        %v268 = vld [vmem:[%s262 + $0x10] sm:$0x3]
        %v269 = vstv %s265
        %v270 = vmul.f32 %v269, %v266
        %v271 = vmul.f32 %v269, %v267
        %v272 = vmul.f32 %v269, %v268
        %s273 = sld [smem:[#allocation4 + $0x1]]
        %v274 = vstv %s273
        %v275 = vmul.f32 %v274, %v266
        %v276 = vmul.f32 %v274, %v267
        %v277 = vmul.f32 %v274, %v268
        %281 = vrot.lane.b32.xlu0 %v275, 127
        %v282 = vpop.permute.xlu0 %281
        %283 = vrot.lane.b32.xlu0 %v276, 127
        %v284 = vpop.permute.xlu0 %283
        %285 = vrot.lane.b32.xlu0 %v277, 127
        %v286 = vpop.permute.xlu0 %285
        %v290 = vadd.f32 %v270, %v282
        %v291 = vadd.f32 %v271, %v284
        %v292 = vadd.f32 %v272, %v286
        %s293 = sld [smem:[#allocation4 + $0x2]]
        %v294 = vstv %s293
        %v295 = vmul.f32 %v294, %v266
        %v296 = vmul.f32 %v294, %v267
        %v297 = vmul.f32 %v294, %v268
        %301 = vrot.lane.b32.xlu0 %v295, 126
        %v302 = vpop.permute.xlu0 %301
        %303 = vrot.lane.b32.xlu0 %v296, 126
        %v304 = vpop.permute.xlu0 %303
        %305 = vrot.lane.b32.xlu0 %v297, 126
        %v306 = vpop.permute.xlu0 %305
        %v310 = vadd.f32 %v290, %v302
        %v311 = vadd.f32 %v291, %v304
        %v312 = vadd.f32 %v292, %v306
        %s313 = sld [smem:[#allocation4 + $0x3]]
        %v314 = vld [vmem:[%s262 + $0x1] sm:$0xff]
        %v315 = vld [vmem:[%s262 + $0x9] sm:$0xff]
        %v316 = vld [vmem:[%s262 + $0x11] sm:$0x3]
        %v317 = vstv %s313
        %v318 = vmul.f32 %v317, %v314
        %v319 = vmul.f32 %v317, %v315
        %v320 = vmul.f32 %v317, %v316
        %v321 = vadd.f32 %v310, %v318
        %v322 = vadd.f32 %v311, %v319
        %v323 = vadd.f32 %v312, %v320
        %s324 = sld [smem:[#allocation4 + $0x4]]
        %v325 = vstv %s324
        %v326 = vmul.f32 %v325, %v314
        %v327 = vmul.f32 %v325, %v315
        %v328 = vmul.f32 %v325, %v316
        %332 = vrot.lane.b32.xlu0 %v326, 127
        %v333 = vpop.permute.xlu0 %332
        %334 = vrot.lane.b32.xlu0 %v327, 127
        %v335 = vpop.permute.xlu0 %334
        %336 = vrot.lane.b32.xlu0 %v328, 127
        %v337 = vpop.permute.xlu0 %336
        %v341 = vadd.f32 %v321, %v333
        %v342 = vadd.f32 %v322, %v335
        %v343 = vadd.f32 %v323, %v337
        %s344 = sld [smem:[#allocation4 + $0x5]]
        %v345 = vstv %s344
        %v346 = vmul.f32 %v345, %v314
        %v347 = vmul.f32 %v345, %v315
        %v348 = vmul.f32 %v345, %v316
        %352 = vrot.lane.b32.xlu0 %v346, 126
        %v353 = vpop.permute.xlu0 %352
        %354 = vrot.lane.b32.xlu0 %v347, 126
        %v355 = vpop.permute.xlu0 %354
        %356 = vrot.lane.b32.xlu0 %v348, 126
        %v357 = vpop.permute.xlu0 %356
        %v361 = vadd.f32 %v341, %v353
        %v362 = vadd.f32 %v342, %v355
        %v363 = vadd.f32 %v343, %v357
        %s364 = sld [smem:[#allocation4 + $0x6]]
        %v365 = vld [vmem:[%s262 + $0x2] sm:$0xff]
        %v366 = vld [vmem:[%s262 + $0xa] sm:$0xff]
        %v367 = vld [vmem:[%s262 + $0x12] sm:$0x3]
        %v368 = vstv %s364
        %v369 = vmul.f32 %v368, %v365
        %v370 = vmul.f32 %v368, %v366
        %v371 = vmul.f32 %v368, %v367
        %v372 = vadd.f32 %v361, %v369
        %v373 = vadd.f32 %v362, %v370
        %v374 = vadd.f32 %v363, %v371
        %s375 = sld [smem:[#allocation4 + $0x7]]
        %v376 = vstv %s375
        %v377 = vmul.f32 %v376, %v365
        %v378 = vmul.f32 %v376, %v366
        %v379 = vmul.f32 %v376, %v367
        %383 = vrot.lane.b32.xlu0 %v377, 127
        %v384 = vpop.permute.xlu0 %383
        %385 = vrot.lane.b32.xlu0 %v378, 127
        %v386 = vpop.permute.xlu0 %385
        %387 = vrot.lane.b32.xlu0 %v379, 127
        %v388 = vpop.permute.xlu0 %387
        %v392 = vadd.f32 %v372, %v384
        %v393 = vadd.f32 %v373, %v386
        %v394 = vadd.f32 %v374, %v388
        %s395 = sld [smem:[#allocation4 + $0x8]]
        %v396 = vstv %s395
        %v397 = vmul.f32 %v396, %v365
        %v398 = vmul.f32 %v396, %v366
        %v399 = vmul.f32 %v396, %v367
        %403 = vrot.lane.b32.xlu0 %v397, 126
        %v404 = vpop.permute.xlu0 %403
        %405 = vrot.lane.b32.xlu0 %v398, 126
        %v406 = vpop.permute.xlu0 %405
        %407 = vrot.lane.b32.xlu0 %v399, 126
        %v408 = vpop.permute.xlu0 %407
        %v412 = vadd.f32 %v392, %v404
        %v413 = vadd.f32 %v393, %v406
        %v414 = vadd.f32 %v394, %v408
        %s415 = ssub.s32 %s264, 1
        %v416 = vlaneseq
        %v417 = vshrl.u32 %v416, 7
        %v418 = vadd.s32 %v417, 8
        %v419 = vadd.s32 %v417, 16
        %v420 = vstv %s415
        %v421 = vadd.s32 %v420, %v417
        %v422 = vadd.s32 %v420, %v418
        %v423 = vadd.s32 %v420, %v419
        %v424 = vlaneseq
        %v425 = vand.u32 %v424, 127
        %vm426 = vcmp.ge.s32.totalorder %v421, 0
        %vm427 = vcmp.ge.s32.totalorder %v422, 0
        %vm428 = vcmp.ge.s32.totalorder %v423, 0
        %vm429 = vcmp.lt.s32.totalorder %v421, 16
        %vm430 = vcmp.lt.s32.totalorder %v422, 16
        %vm431 = vcmp.lt.s32.totalorder %v423, 16
        %vm432 = vmand %vm426, %vm429
        %vm433 = vmand %vm427, %vm430
        %vm434 = vmand %vm428, %vm431
        %vm435 = vcmp.ge.s32.totalorder %v425, 1
        %vm436 = vmand %vm432, %vm435
        %vm437 = vmand %vm433, %vm435
        %vm438 = vmand %vm434, %vm435
        %vm439 = vcmp.le.s32.totalorder %v425, 16
        %vm440 = vmand %vm436, %vm439
        %vm441 = vmand %vm437, %vm439
        %vm442 = vmand %vm438, %vm439
        %v443 = vmul.f32 %v412, 1.442695
        %v444 = vpow.pop %v443
        %v445 = vmul.f32 %v413, 1.442695
        %v446 = vpow.pop %v445
        %v447 = vmul.f32 %v414, 1.442695
        %v448 = vpow.pop %v447
        %v449 = vsel %vm440, %v444, 0.0
        %v450 = vsel %vm441, %v446, 0.0
        %v451 = vsel %vm442, %v448, 0.0
        %vm452 = vcmask 146432
        %453 = vst.msk [vmem:[#allocation2] sm:$0xff] %vm452, %v449
        %454 = vst.msk [vmem:[#allocation2 + $0x8] sm:$0xff] %vm452, %v450
        %vm455 = vcmask 140288
        %456 = vst.msk [vmem:[#allocation2 + $0x10] sm:$0x3] %vm455, %v451
        %v457 = vld [vmem:[#allocation2] sm:$0xff]
        %v458 = vld [vmem:[#allocation2 + $0x8] sm:$0xff]
        %v459 = vld [vmem:[#allocation2 + $0x10] sm:$0x3]
        %s460 = sld [smem:[#allocation7]]
        %v461 = vstv %s460
        %v462 = vmul.f32 %v457, %v461
        %v463 = vmul.f32 %v458, %v461
        %v464 = vmul.f32 %v459, %v461
        %v465 = vadd.f32 %v462, 1.0
        %v466 = vadd.f32 %v463, 1.0
        %v467 = vadd.f32 %v464, 1.0
        %v468 = vrcp.pop %v465
        %v469 = vrcp.pop %v466
        %v470 = vrcp.pop %v467
        %v471 = vmul.f32 %v468, %v468
        %v472 = vmul.f32 %v469, %v469
        %v473 = vmul.f32 %v470, %v470
        %v474 = vmul.f32 %v462, %v471
        %v475 = vmul.f32 %v463, %v472
        %v476 = vmul.f32 %v464, %v473
        %477 = vst.msk [vmem:[#allocation3] sm:$0xff] %vm452, %v474
        %478 = vst.msk [vmem:[#allocation3 + $0x8] sm:$0xff] %vm452, %v475
        %479 = vst.msk [vmem:[#allocation3 + $0x10] sm:$0x3] %vm455, %v476
        %s480 = sld [smem:[#allocation9]]
        %v481 = vld [vmem:[#allocation3] sm:$0xff]
        %v482 = vld [vmem:[#allocation3 + $0x8] sm:$0xff]
        %v483 = vstv %s480
        %v484 = vmul.f32 %v483, %v481
        %v485 = vmul.f32 %v483, %v482
        %s486 = sld [smem:[#allocation9 + $0x1]]
        %v487 = vstv %s486
        %v488 = vmul.f32 %v487, %v481
        %v489 = vmul.f32 %v487, %v482
        %492 = vrot.lane.b32.xlu0 %v488, 127
        %v493 = vpop.permute.xlu0 %492
        %494 = vrot.lane.b32.xlu0 %v489, 127
        %v495 = vpop.permute.xlu0 %494
        %v498 = vadd.f32 %v484, %v493
        %v499 = vadd.f32 %v485, %v495
        %s500 = sld [smem:[#allocation9 + $0x2]]
        %v501 = vstv %s500
        %v502 = vmul.f32 %v501, %v481
        %v503 = vmul.f32 %v501, %v482
        %506 = vrot.lane.b32.xlu0 %v502, 126
        %v507 = vpop.permute.xlu0 %506
        %508 = vrot.lane.b32.xlu0 %v503, 126
        %v509 = vpop.permute.xlu0 %508
        %v512 = vadd.f32 %v498, %v507
        %v513 = vadd.f32 %v499, %v509
        %s514 = sld [smem:[#allocation9 + $0x3]]
        %v515 = vld [vmem:[#allocation3 + $0x1] sm:$0xff]
        %v516 = vld [vmem:[#allocation3 + $0x9] sm:$0xff]
        %v517 = vstv %s514
        %v518 = vmul.f32 %v517, %v515
        %v519 = vmul.f32 %v517, %v516
        %v520 = vadd.f32 %v512, %v518
        %v521 = vadd.f32 %v513, %v519
        %s522 = sld [smem:[#allocation9 + $0x4]]
        %v523 = vstv %s522
        %v524 = vmul.f32 %v523, %v515
        %v525 = vmul.f32 %v523, %v516
        %528 = vrot.lane.b32.xlu0 %v524, 127
        %v529 = vpop.permute.xlu0 %528
        %530 = vrot.lane.b32.xlu0 %v525, 127
        %v531 = vpop.permute.xlu0 %530
        %v534 = vadd.f32 %v520, %v529
        %v535 = vadd.f32 %v521, %v531
        %s536 = sld [smem:[#allocation9 + $0x5]]
        %v537 = vstv %s536
        %v538 = vmul.f32 %v537, %v515
        %v539 = vmul.f32 %v537, %v516
        %542 = vrot.lane.b32.xlu0 %v538, 126
        %v543 = vpop.permute.xlu0 %542
        %544 = vrot.lane.b32.xlu0 %v539, 126
        %v545 = vpop.permute.xlu0 %544
        %v548 = vadd.f32 %v534, %v543
        %v549 = vadd.f32 %v535, %v545
        %s550 = sld [smem:[#allocation9 + $0x6]]
        %v551 = vld [vmem:[#allocation3 + $0x2] sm:$0xff]
        %v552 = vld [vmem:[#allocation3 + $0xa] sm:$0xff]
        %v553 = vstv %s550
        %v554 = vmul.f32 %v553, %v551
        %v555 = vmul.f32 %v553, %v552
        %v556 = vadd.f32 %v548, %v554
        %v557 = vadd.f32 %v549, %v555
        %s558 = sld [smem:[#allocation9 + $0x7]]
        %v559 = vstv %s558
        %v560 = vmul.f32 %v559, %v551
        %v561 = vmul.f32 %v559, %v552
        %564 = vrot.lane.b32.xlu0 %v560, 127
        %v565 = vpop.permute.xlu0 %564
        %566 = vrot.lane.b32.xlu0 %v561, 127
        %v567 = vpop.permute.xlu0 %566
        %v570 = vadd.f32 %v556, %v565
        %v571 = vadd.f32 %v557, %v567
        %s572 = sld [smem:[#allocation9 + $0x8]]
        %v573 = vstv %s572
        %v574 = vmul.f32 %v573, %v551
        %v575 = vmul.f32 %v573, %v552
        %578 = vrot.lane.b32.xlu0 %v574, 126
        %v579 = vpop.permute.xlu0 %578
        %580 = vrot.lane.b32.xlu0 %v575, 126
        %v581 = vpop.permute.xlu0 %580
        %v584 = vadd.f32 %v570, %v579
        %v585 = vadd.f32 %v571, %v581
        %vm586 = vcmask 130048
        %587 = vst.msk [vmem:[%s253] sm:$0xff] %vm586, %v584
        %588 = vst.msk [vmem:[%s253 + $0x8] sm:$0xff] %vm586, %v585
        %v589 = vld [vmem:[#allocation2] sm:$0xff]
        %v590 = vld [vmem:[#allocation2 + $0x8] sm:$0xff]
        %v591 = vld [vmem:[#allocation2 + $0x10] sm:$0x3]
        %s592 = sld [smem:[#allocation7 + $0x1]]
        %v593 = vstv %s592
        %v594 = vmul.f32 %v589, %v593
        %v595 = vmul.f32 %v590, %v593
        %v596 = vmul.f32 %v591, %v593
        %v597 = vadd.f32 %v594, 1.0
        %v598 = vadd.f32 %v595, 1.0
        %v599 = vadd.f32 %v596, 1.0
        %v600 = vrcp.pop %v597
        %v601 = vrcp.pop %v598
        %v602 = vrcp.pop %v599
        %v603 = vmul.f32 %v600, %v600
        %v604 = vmul.f32 %v601, %v601
        %v605 = vmul.f32 %v602, %v602
        %v606 = vmul.f32 %v594, %v603
        %v607 = vmul.f32 %v595, %v604
        %v608 = vmul.f32 %v596, %v605
        %609 = vst.msk [vmem:[#allocation3] sm:$0xff] %vm452, %v606
        %610 = vst.msk [vmem:[#allocation3 + $0x8] sm:$0xff] %vm452, %v607
        %611 = vst.msk [vmem:[#allocation3 + $0x10] sm:$0x3] %vm455, %v608
        %s612 = sld [smem:[#allocation9]]
        %v613 = vld [vmem:[#allocation3] sm:$0xff]
        %v614 = vld [vmem:[#allocation3 + $0x8] sm:$0xff]
        %v615 = vstv %s612
        %v616 = vmul.f32 %v615, %v613
        %v617 = vmul.f32 %v615, %v614
        %s618 = sld [smem:[#allocation9 + $0x1]]
        %v619 = vstv %s618
        %v620 = vmul.f32 %v619, %v613
        %v621 = vmul.f32 %v619, %v614
        %624 = vrot.lane.b32.xlu0 %v620, 127
        %v625 = vpop.permute.xlu0 %624
        %626 = vrot.lane.b32.xlu0 %v621, 127
        %v627 = vpop.permute.xlu0 %626
        %v630 = vadd.f32 %v616, %v625
        %v631 = vadd.f32 %v617, %v627
        %s632 = sld [smem:[#allocation9 + $0x2]]
        %v633 = vstv %s632
        %v634 = vmul.f32 %v633, %v613
        %v635 = vmul.f32 %v633, %v614
        %638 = vrot.lane.b32.xlu0 %v634, 126
        %v639 = vpop.permute.xlu0 %638
        %640 = vrot.lane.b32.xlu0 %v635, 126
        %v641 = vpop.permute.xlu0 %640
        %v644 = vadd.f32 %v630, %v639
        %v645 = vadd.f32 %v631, %v641
        %s646 = sld [smem:[#allocation9 + $0x3]]
        %v647 = vld [vmem:[#allocation3 + $0x1] sm:$0xff]
        %v648 = vld [vmem:[#allocation3 + $0x9] sm:$0xff]
        %v649 = vstv %s646
        %v650 = vmul.f32 %v649, %v647
        %v651 = vmul.f32 %v649, %v648
        %v652 = vadd.f32 %v644, %v650
        %v653 = vadd.f32 %v645, %v651
        %s654 = sld [smem:[#allocation9 + $0x4]]
        %v655 = vstv %s654
        %v656 = vmul.f32 %v655, %v647
        %v657 = vmul.f32 %v655, %v648
        %660 = vrot.lane.b32.xlu0 %v656, 127
        %v661 = vpop.permute.xlu0 %660
        %662 = vrot.lane.b32.xlu0 %v657, 127
        %v663 = vpop.permute.xlu0 %662
        %v666 = vadd.f32 %v652, %v661
        %v667 = vadd.f32 %v653, %v663
        %s668 = sld [smem:[#allocation9 + $0x5]]
        %v669 = vstv %s668
        %v670 = vmul.f32 %v669, %v647
        %v671 = vmul.f32 %v669, %v648
        %674 = vrot.lane.b32.xlu0 %v670, 126
        %v675 = vpop.permute.xlu0 %674
        %676 = vrot.lane.b32.xlu0 %v671, 126
        %v677 = vpop.permute.xlu0 %676
        %v680 = vadd.f32 %v666, %v675
        %v681 = vadd.f32 %v667, %v677
        %s682 = sld [smem:[#allocation9 + $0x6]]
        %v683 = vld [vmem:[#allocation3 + $0x2] sm:$0xff]
        %v684 = vld [vmem:[#allocation3 + $0xa] sm:$0xff]
        %v685 = vstv %s682
        %v686 = vmul.f32 %v685, %v683
        %v687 = vmul.f32 %v685, %v684
        %v688 = vadd.f32 %v680, %v686
        %v689 = vadd.f32 %v681, %v687
        %s690 = sld [smem:[#allocation9 + $0x7]]
        %v691 = vstv %s690
        %v692 = vmul.f32 %v691, %v683
        %v693 = vmul.f32 %v691, %v684
        %696 = vrot.lane.b32.xlu0 %v692, 127
        %v697 = vpop.permute.xlu0 %696
        %698 = vrot.lane.b32.xlu0 %v693, 127
        %v699 = vpop.permute.xlu0 %698
        %v702 = vadd.f32 %v688, %v697
        %v703 = vadd.f32 %v689, %v699
        %s704 = sld [smem:[#allocation9 + $0x8]]
        %v705 = vstv %s704
        %v706 = vmul.f32 %v705, %v683
        %v707 = vmul.f32 %v705, %v684
        %710 = vrot.lane.b32.xlu0 %v706, 126
        %v711 = vpop.permute.xlu0 %710
        %712 = vrot.lane.b32.xlu0 %v707, 126
        %v713 = vpop.permute.xlu0 %712
        %v716 = vadd.f32 %v702, %v711
        %v717 = vadd.f32 %v703, %v713
        %s718 = scalar_lea.vmem %s253, 16 [#allocation10]
        %719 = vst.msk [vmem:[%s718] sm:$0xff] %vm586, %v716
        %720 = vst.msk [vmem:[%s718 + $0x8] sm:$0xff] %vm586, %v717
        %v721 = vld [vmem:[#allocation2] sm:$0xff]
        %v722 = vld [vmem:[#allocation2 + $0x8] sm:$0xff]
        %v723 = vld [vmem:[#allocation2 + $0x10] sm:$0x3]
        %s724 = sld [smem:[#allocation7 + $0x2]]
        %v725 = vstv %s724
        %v726 = vmul.f32 %v721, %v725
        %v727 = vmul.f32 %v722, %v725
        %v728 = vmul.f32 %v723, %v725
        %v729 = vadd.f32 %v726, 1.0
        %v730 = vadd.f32 %v727, 1.0
        %v731 = vadd.f32 %v728, 1.0
        %v732 = vrcp.pop %v729
        %v733 = vrcp.pop %v730
        %v734 = vrcp.pop %v731
        %v735 = vmul.f32 %v732, %v732
        %v736 = vmul.f32 %v733, %v733
        %v737 = vmul.f32 %v734, %v734
        %v738 = vmul.f32 %v726, %v735
        %v739 = vmul.f32 %v727, %v736
        %v740 = vmul.f32 %v728, %v737
        %741 = vst.msk [vmem:[#allocation3] sm:$0xff] %vm452, %v738
        %742 = vst.msk [vmem:[#allocation3 + $0x8] sm:$0xff] %vm452, %v739
        %743 = vst.msk [vmem:[#allocation3 + $0x10] sm:$0x3] %vm455, %v740
        %s744 = sld [smem:[#allocation9]]
        %v745 = vld [vmem:[#allocation3] sm:$0xff]
        %v746 = vld [vmem:[#allocation3 + $0x8] sm:$0xff]
        %v747 = vstv %s744
        %v748 = vmul.f32 %v747, %v745
        %v749 = vmul.f32 %v747, %v746
        %s750 = sld [smem:[#allocation9 + $0x1]]
        %v751 = vstv %s750
        %v752 = vmul.f32 %v751, %v745
        %v753 = vmul.f32 %v751, %v746
        %756 = vrot.lane.b32.xlu0 %v752, 127
        %v757 = vpop.permute.xlu0 %756
        %758 = vrot.lane.b32.xlu0 %v753, 127
        %v759 = vpop.permute.xlu0 %758
        %v762 = vadd.f32 %v748, %v757
        %v763 = vadd.f32 %v749, %v759
        %s764 = sld [smem:[#allocation9 + $0x2]]
        %v765 = vstv %s764
        %v766 = vmul.f32 %v765, %v745
        %v767 = vmul.f32 %v765, %v746
        %770 = vrot.lane.b32.xlu0 %v766, 126
        %v771 = vpop.permute.xlu0 %770
        %772 = vrot.lane.b32.xlu0 %v767, 126
        %v773 = vpop.permute.xlu0 %772
        %v776 = vadd.f32 %v762, %v771
        %v777 = vadd.f32 %v763, %v773
        %s778 = sld [smem:[#allocation9 + $0x3]]
        %v779 = vld [vmem:[#allocation3 + $0x1] sm:$0xff]
        %v780 = vld [vmem:[#allocation3 + $0x9] sm:$0xff]
        %v781 = vstv %s778
        %v782 = vmul.f32 %v781, %v779
        %v783 = vmul.f32 %v781, %v780
        %v784 = vadd.f32 %v776, %v782
        %v785 = vadd.f32 %v777, %v783
        %s786 = sld [smem:[#allocation9 + $0x4]]
        %v787 = vstv %s786
        %v788 = vmul.f32 %v787, %v779
        %v789 = vmul.f32 %v787, %v780
        %792 = vrot.lane.b32.xlu0 %v788, 127
        %v793 = vpop.permute.xlu0 %792
        %794 = vrot.lane.b32.xlu0 %v789, 127
        %v795 = vpop.permute.xlu0 %794
        %v798 = vadd.f32 %v784, %v793
        %v799 = vadd.f32 %v785, %v795
        %s800 = sld [smem:[#allocation9 + $0x5]]
        %v801 = vstv %s800
        %v802 = vmul.f32 %v801, %v779
        %v803 = vmul.f32 %v801, %v780
        %806 = vrot.lane.b32.xlu0 %v802, 126
        %v807 = vpop.permute.xlu0 %806
        %808 = vrot.lane.b32.xlu0 %v803, 126
        %v809 = vpop.permute.xlu0 %808
        %v812 = vadd.f32 %v798, %v807
        %v813 = vadd.f32 %v799, %v809
        %s814 = sld [smem:[#allocation9 + $0x6]]
        %v815 = vld [vmem:[#allocation3 + $0x2] sm:$0xff]
        %v816 = vld [vmem:[#allocation3 + $0xa] sm:$0xff]
        %v817 = vstv %s814
        %v818 = vmul.f32 %v817, %v815
        %v819 = vmul.f32 %v817, %v816
        %v820 = vadd.f32 %v812, %v818
        %v821 = vadd.f32 %v813, %v819
        %s822 = sld [smem:[#allocation9 + $0x7]]
        %v823 = vstv %s822
        %v824 = vmul.f32 %v823, %v815
        %v825 = vmul.f32 %v823, %v816
        %828 = vrot.lane.b32.xlu0 %v824, 127
        %v829 = vpop.permute.xlu0 %828
        %830 = vrot.lane.b32.xlu0 %v825, 127
        %v831 = vpop.permute.xlu0 %830
        %v834 = vadd.f32 %v820, %v829
        %v835 = vadd.f32 %v821, %v831
        %s836 = sld [smem:[#allocation9 + $0x8]]
        %v837 = vstv %s836
        %v838 = vmul.f32 %v837, %v815
        %v839 = vmul.f32 %v837, %v816
        %842 = vrot.lane.b32.xlu0 %v838, 126
        %v843 = vpop.permute.xlu0 %842
        %844 = vrot.lane.b32.xlu0 %v839, 126
        %v845 = vpop.permute.xlu0 %844
        %v848 = vadd.f32 %v834, %v843
        %v849 = vadd.f32 %v835, %v845
        %s850 = scalar_lea.vmem %s253, 32 [#allocation10]
        %851 = vst.msk [vmem:[%s850] sm:$0xff] %vm586, %v848
        %852 = vst.msk [vmem:[%s850 + $0x8] sm:$0xff] %vm586, %v849
        %v853 = vld [vmem:[#allocation2] sm:$0xff]
        %v854 = vld [vmem:[#allocation2 + $0x8] sm:$0xff]
        %v855 = vld [vmem:[#allocation2 + $0x10] sm:$0x3]
        %s856 = sld [smem:[#allocation7 + $0x3]]
        %v857 = vstv %s856
        %v858 = vmul.f32 %v853, %v857
        %v859 = vmul.f32 %v854, %v857
        %v860 = vmul.f32 %v855, %v857
        %v861 = vadd.f32 %v858, 1.0
        %v862 = vadd.f32 %v859, 1.0
        %v863 = vadd.f32 %v860, 1.0
        %v864 = vrcp.pop %v861
        %v865 = vrcp.pop %v862
        %v866 = vrcp.pop %v863
        %v867 = vmul.f32 %v864, %v864
        %v868 = vmul.f32 %v865, %v865
        %v869 = vmul.f32 %v866, %v866
        %v870 = vmul.f32 %v858, %v867
        %v871 = vmul.f32 %v859, %v868
        %v872 = vmul.f32 %v860, %v869
        %873 = vst.msk [vmem:[#allocation3] sm:$0xff] %vm452, %v870
        %874 = vst.msk [vmem:[#allocation3 + $0x8] sm:$0xff] %vm452, %v871
        %875 = vst.msk [vmem:[#allocation3 + $0x10] sm:$0x3] %vm455, %v872
        %s876 = sld [smem:[#allocation9]]
        %v877 = vld [vmem:[#allocation3] sm:$0xff]
        %v878 = vld [vmem:[#allocation3 + $0x8] sm:$0xff]
        %v879 = vstv %s876
        %v880 = vmul.f32 %v879, %v877
        %v881 = vmul.f32 %v879, %v878
        %s882 = sld [smem:[#allocation9 + $0x1]]
        %v883 = vstv %s882
        %v884 = vmul.f32 %v883, %v877
        %v885 = vmul.f32 %v883, %v878
        %888 = vrot.lane.b32.xlu0 %v884, 127
        %v889 = vpop.permute.xlu0 %888
        %890 = vrot.lane.b32.xlu0 %v885, 127
        %v891 = vpop.permute.xlu0 %890
        %v894 = vadd.f32 %v880, %v889
        %v895 = vadd.f32 %v881, %v891
        %s896 = sld [smem:[#allocation9 + $0x2]]
        %v897 = vstv %s896
        %v898 = vmul.f32 %v897, %v877
        %v899 = vmul.f32 %v897, %v878
        %902 = vrot.lane.b32.xlu0 %v898, 126
        %v903 = vpop.permute.xlu0 %902
        %904 = vrot.lane.b32.xlu0 %v899, 126
        %v905 = vpop.permute.xlu0 %904
        %v908 = vadd.f32 %v894, %v903
        %v909 = vadd.f32 %v895, %v905
        %s910 = sld [smem:[#allocation9 + $0x3]]
        %v911 = vld [vmem:[#allocation3 + $0x1] sm:$0xff]
        %v912 = vld [vmem:[#allocation3 + $0x9] sm:$0xff]
        %v913 = vstv %s910
        %v914 = vmul.f32 %v913, %v911
        %v915 = vmul.f32 %v913, %v912
        %v916 = vadd.f32 %v908, %v914
        %v917 = vadd.f32 %v909, %v915
        %s918 = sld [smem:[#allocation9 + $0x4]]
        %v919 = vstv %s918
        %v920 = vmul.f32 %v919, %v911
        %v921 = vmul.f32 %v919, %v912
        %924 = vrot.lane.b32.xlu0 %v920, 127
        %v925 = vpop.permute.xlu0 %924
        %926 = vrot.lane.b32.xlu0 %v921, 127
        %v927 = vpop.permute.xlu0 %926
        %v930 = vadd.f32 %v916, %v925
        %v931 = vadd.f32 %v917, %v927
        %s932 = sld [smem:[#allocation9 + $0x5]]
        %v933 = vstv %s932
        %v934 = vmul.f32 %v933, %v911
        %v935 = vmul.f32 %v933, %v912
        %938 = vrot.lane.b32.xlu0 %v934, 126
        %v939 = vpop.permute.xlu0 %938
        %940 = vrot.lane.b32.xlu0 %v935, 126
        %v941 = vpop.permute.xlu0 %940
        %v944 = vadd.f32 %v930, %v939
        %v945 = vadd.f32 %v931, %v941
        %s946 = sld [smem:[#allocation9 + $0x6]]
        %v947 = vld [vmem:[#allocation3 + $0x2] sm:$0xff]
        %v948 = vld [vmem:[#allocation3 + $0xa] sm:$0xff]
        %v949 = vstv %s946
        %v950 = vmul.f32 %v949, %v947
        %v951 = vmul.f32 %v949, %v948
        %v952 = vadd.f32 %v944, %v950
        %v953 = vadd.f32 %v945, %v951
        %s954 = sld [smem:[#allocation9 + $0x7]]
        %v955 = vstv %s954
        %v956 = vmul.f32 %v955, %v947
        %v957 = vmul.f32 %v955, %v948
        %960 = vrot.lane.b32.xlu0 %v956, 127
        %v961 = vpop.permute.xlu0 %960
        %962 = vrot.lane.b32.xlu0 %v957, 127
        %v963 = vpop.permute.xlu0 %962
        %v966 = vadd.f32 %v952, %v961
        %v967 = vadd.f32 %v953, %v963
        %s968 = sld [smem:[#allocation9 + $0x8]]
        %v969 = vstv %s968
        %v970 = vmul.f32 %v969, %v947
        %v971 = vmul.f32 %v969, %v948
        %974 = vrot.lane.b32.xlu0 %v970, 126
        %v975 = vpop.permute.xlu0 %974
        %976 = vrot.lane.b32.xlu0 %v971, 126
        %v977 = vpop.permute.xlu0 %976
        %v980 = vadd.f32 %v966, %v975
        %v981 = vadd.f32 %v967, %v977
        %s982 = scalar_lea.vmem %s253, 48 [#allocation10]
        %983 = vst.msk [vmem:[%s982] sm:$0xff] %vm586, %v980
        %984 = vst.msk [vmem:[%s982 + $0x8] sm:$0xff] %vm586, %v981
        %v985 = vld [vmem:[#allocation2] sm:$0xff]
        %v986 = vld [vmem:[#allocation2 + $0x8] sm:$0xff]
        %v987 = vld [vmem:[#allocation2 + $0x10] sm:$0x3]
        %s988 = sld [smem:[#allocation7 + $0x4]]
        %v989 = vstv %s988
        %v990 = vmul.f32 %v985, %v989
        %v991 = vmul.f32 %v986, %v989
        %v992 = vmul.f32 %v987, %v989
        %v993 = vadd.f32 %v990, 1.0
        %v994 = vadd.f32 %v991, 1.0
        %v995 = vadd.f32 %v992, 1.0
        %v996 = vrcp.pop %v993
        %v997 = vrcp.pop %v994
        %v998 = vrcp.pop %v995
        %v999 = vmul.f32 %v996, %v996
        %v1000 = vmul.f32 %v997, %v997
        %v1001 = vmul.f32 %v998, %v998
        %v1002 = vmul.f32 %v990, %v999
        %v1003 = vmul.f32 %v991, %v1000
        %v1004 = vmul.f32 %v992, %v1001
        %1005 = vst.msk [vmem:[#allocation3] sm:$0xff] %vm452, %v1002
        %1006 = vst.msk [vmem:[#allocation3 + $0x8] sm:$0xff] %vm452, %v1003
        %1007 = vst.msk [vmem:[#allocation3 + $0x10] sm:$0x3] %vm455, %v1004
        %s1008 = sld [smem:[#allocation9]]
        %v1009 = vld [vmem:[#allocation3] sm:$0xff]
        %v1010 = vld [vmem:[#allocation3 + $0x8] sm:$0xff]
        %v1011 = vstv %s1008
        %v1012 = vmul.f32 %v1011, %v1009
        %v1013 = vmul.f32 %v1011, %v1010
        %s1014 = sld [smem:[#allocation9 + $0x1]]
        %v1015 = vstv %s1014
        %v1016 = vmul.f32 %v1015, %v1009
        %v1017 = vmul.f32 %v1015, %v1010
        %1020 = vrot.lane.b32.xlu0 %v1016, 127
        %v1021 = vpop.permute.xlu0 %1020
        %1022 = vrot.lane.b32.xlu0 %v1017, 127
        %v1023 = vpop.permute.xlu0 %1022
        %v1026 = vadd.f32 %v1012, %v1021
        %v1027 = vadd.f32 %v1013, %v1023
        %s1028 = sld [smem:[#allocation9 + $0x2]]
        %v1029 = vstv %s1028
        %v1030 = vmul.f32 %v1029, %v1009
        %v1031 = vmul.f32 %v1029, %v1010
        %1034 = vrot.lane.b32.xlu0 %v1030, 126
        %v1035 = vpop.permute.xlu0 %1034
        %1036 = vrot.lane.b32.xlu0 %v1031, 126
        %v1037 = vpop.permute.xlu0 %1036
        %v1040 = vadd.f32 %v1026, %v1035
        %v1041 = vadd.f32 %v1027, %v1037
        %s1042 = sld [smem:[#allocation9 + $0x3]]
        %v1043 = vld [vmem:[#allocation3 + $0x1] sm:$0xff]
        %v1044 = vld [vmem:[#allocation3 + $0x9] sm:$0xff]
        %v1045 = vstv %s1042
        %v1046 = vmul.f32 %v1045, %v1043
        %v1047 = vmul.f32 %v1045, %v1044
        %v1048 = vadd.f32 %v1040, %v1046
        %v1049 = vadd.f32 %v1041, %v1047
        %s1050 = sld [smem:[#allocation9 + $0x4]]
        %v1051 = vstv %s1050
        %v1052 = vmul.f32 %v1051, %v1043
        %v1053 = vmul.f32 %v1051, %v1044
        %1056 = vrot.lane.b32.xlu0 %v1052, 127
        %v1057 = vpop.permute.xlu0 %1056
        %1058 = vrot.lane.b32.xlu0 %v1053, 127
        %v1059 = vpop.permute.xlu0 %1058
        %v1062 = vadd.f32 %v1048, %v1057
        %v1063 = vadd.f32 %v1049, %v1059
        %s1064 = sld [smem:[#allocation9 + $0x5]]
        %v1065 = vstv %s1064
        %v1066 = vmul.f32 %v1065, %v1043
        %v1067 = vmul.f32 %v1065, %v1044
        %1070 = vrot.lane.b32.xlu0 %v1066, 126
        %v1071 = vpop.permute.xlu0 %1070
        %1072 = vrot.lane.b32.xlu0 %v1067, 126
        %v1073 = vpop.permute.xlu0 %1072
        %v1076 = vadd.f32 %v1062, %v1071
        %v1077 = vadd.f32 %v1063, %v1073
        %s1078 = sld [smem:[#allocation9 + $0x6]]
        %v1079 = vld [vmem:[#allocation3 + $0x2] sm:$0xff]
        %v1080 = vld [vmem:[#allocation3 + $0xa] sm:$0xff]
        %v1081 = vstv %s1078
        %v1082 = vmul.f32 %v1081, %v1079
        %v1083 = vmul.f32 %v1081, %v1080
        %v1084 = vadd.f32 %v1076, %v1082
        %v1085 = vadd.f32 %v1077, %v1083
        %s1086 = sld [smem:[#allocation9 + $0x7]]
        %v1087 = vstv %s1086
        %v1088 = vmul.f32 %v1087, %v1079
        %v1089 = vmul.f32 %v1087, %v1080
        %1092 = vrot.lane.b32.xlu0 %v1088, 127
        %v1093 = vpop.permute.xlu0 %1092
        %1094 = vrot.lane.b32.xlu0 %v1089, 127
        %v1095 = vpop.permute.xlu0 %1094
        %v1098 = vadd.f32 %v1084, %v1093
        %v1099 = vadd.f32 %v1085, %v1095
        %s1100 = sld [smem:[#allocation9 + $0x8]]
        %v1101 = vstv %s1100
        %v1102 = vmul.f32 %v1101, %v1079
        %v1103 = vmul.f32 %v1101, %v1080
        %1106 = vrot.lane.b32.xlu0 %v1102, 126
        %v1107 = vpop.permute.xlu0 %1106
        %1108 = vrot.lane.b32.xlu0 %v1103, 126
        %v1109 = vpop.permute.xlu0 %1108
        %v1112 = vadd.f32 %v1098, %v1107
        %v1113 = vadd.f32 %v1099, %v1109
        %s1114 = scalar_lea.vmem %s253, 64 [#allocation10]
        %1115 = vst.msk [vmem:[%s1114] sm:$0xff] %vm586, %v1112
        %1116 = vst.msk [vmem:[%s1114 + $0x8] sm:$0xff] %vm586, %v1113
        %v1117 = vld [vmem:[#allocation2] sm:$0xff]
        %v1118 = vld [vmem:[#allocation2 + $0x8] sm:$0xff]
        %v1119 = vld [vmem:[#allocation2 + $0x10] sm:$0x3]
        %s1120 = sld [smem:[#allocation7 + $0x5]]
        %v1121 = vstv %s1120
        %v1122 = vmul.f32 %v1117, %v1121
        %v1123 = vmul.f32 %v1118, %v1121
        %v1124 = vmul.f32 %v1119, %v1121
        %v1125 = vadd.f32 %v1122, 1.0
        %v1126 = vadd.f32 %v1123, 1.0
        %v1127 = vadd.f32 %v1124, 1.0
        %v1128 = vrcp.pop %v1125
        %v1129 = vrcp.pop %v1126
        %v1130 = vrcp.pop %v1127
        %v1131 = vmul.f32 %v1128, %v1128
        %v1132 = vmul.f32 %v1129, %v1129
        %v1133 = vmul.f32 %v1130, %v1130
        %v1134 = vmul.f32 %v1122, %v1131
        %v1135 = vmul.f32 %v1123, %v1132
        %v1136 = vmul.f32 %v1124, %v1133
        %1137 = vst.msk [vmem:[#allocation3] sm:$0xff] %vm452, %v1134
        %1138 = vst.msk [vmem:[#allocation3 + $0x8] sm:$0xff] %vm452, %v1135
        %1139 = vst.msk [vmem:[#allocation3 + $0x10] sm:$0x3] %vm455, %v1136
        %s1140 = sld [smem:[#allocation9]]
        %v1141 = vld [vmem:[#allocation3] sm:$0xff]
        %v1142 = vld [vmem:[#allocation3 + $0x8] sm:$0xff]
        %v1143 = vstv %s1140
        %v1144 = vmul.f32 %v1143, %v1141
        %v1145 = vmul.f32 %v1143, %v1142
        %s1146 = sld [smem:[#allocation9 + $0x1]]
        %v1147 = vstv %s1146
        %v1148 = vmul.f32 %v1147, %v1141
        %v1149 = vmul.f32 %v1147, %v1142
        %1152 = vrot.lane.b32.xlu0 %v1148, 127
        %v1153 = vpop.permute.xlu0 %1152
        %1154 = vrot.lane.b32.xlu0 %v1149, 127
        %v1155 = vpop.permute.xlu0 %1154
        %v1158 = vadd.f32 %v1144, %v1153
        %v1159 = vadd.f32 %v1145, %v1155
        %s1160 = sld [smem:[#allocation9 + $0x2]]
        %v1161 = vstv %s1160
        %v1162 = vmul.f32 %v1161, %v1141
        %v1163 = vmul.f32 %v1161, %v1142
        %1166 = vrot.lane.b32.xlu0 %v1162, 126
        %v1167 = vpop.permute.xlu0 %1166
        %1168 = vrot.lane.b32.xlu0 %v1163, 126
        %v1169 = vpop.permute.xlu0 %1168
        %v1172 = vadd.f32 %v1158, %v1167
        %v1173 = vadd.f32 %v1159, %v1169
        %s1174 = sld [smem:[#allocation9 + $0x3]]
        %v1175 = vld [vmem:[#allocation3 + $0x1] sm:$0xff]
        %v1176 = vld [vmem:[#allocation3 + $0x9] sm:$0xff]
        %v1177 = vstv %s1174
        %v1178 = vmul.f32 %v1177, %v1175
        %v1179 = vmul.f32 %v1177, %v1176
        %v1180 = vadd.f32 %v1172, %v1178
        %v1181 = vadd.f32 %v1173, %v1179
        %s1182 = sld [smem:[#allocation9 + $0x4]]
        %v1183 = vstv %s1182
        %v1184 = vmul.f32 %v1183, %v1175
        %v1185 = vmul.f32 %v1183, %v1176
        %1188 = vrot.lane.b32.xlu0 %v1184, 127
        %v1189 = vpop.permute.xlu0 %1188
        %1190 = vrot.lane.b32.xlu0 %v1185, 127
        %v1191 = vpop.permute.xlu0 %1190
        %v1194 = vadd.f32 %v1180, %v1189
        %v1195 = vadd.f32 %v1181, %v1191
        %s1196 = sld [smem:[#allocation9 + $0x5]]
        %v1197 = vstv %s1196
        %v1198 = vmul.f32 %v1197, %v1175
        %v1199 = vmul.f32 %v1197, %v1176
        %1202 = vrot.lane.b32.xlu0 %v1198, 126
        %v1203 = vpop.permute.xlu0 %1202
        %1204 = vrot.lane.b32.xlu0 %v1199, 126
        %v1205 = vpop.permute.xlu0 %1204
        %v1208 = vadd.f32 %v1194, %v1203
        %v1209 = vadd.f32 %v1195, %v1205
        %s1210 = sld [smem:[#allocation9 + $0x6]]
        %v1211 = vld [vmem:[#allocation3 + $0x2] sm:$0xff]
        %v1212 = vld [vmem:[#allocation3 + $0xa] sm:$0xff]
        %v1213 = vstv %s1210
        %v1214 = vmul.f32 %v1213, %v1211
        %v1215 = vmul.f32 %v1213, %v1212
        %v1216 = vadd.f32 %v1208, %v1214
        %v1217 = vadd.f32 %v1209, %v1215
        %s1218 = sld [smem:[#allocation9 + $0x7]]
        %v1219 = vstv %s1218
        %v1220 = vmul.f32 %v1219, %v1211
        %v1221 = vmul.f32 %v1219, %v1212
        %1224 = vrot.lane.b32.xlu0 %v1220, 127
        %v1225 = vpop.permute.xlu0 %1224
        %1226 = vrot.lane.b32.xlu0 %v1221, 127
        %v1227 = vpop.permute.xlu0 %1226
        %v1230 = vadd.f32 %v1216, %v1225
        %v1231 = vadd.f32 %v1217, %v1227
        %s1232 = sld [smem:[#allocation9 + $0x8]]
        %v1233 = vstv %s1232
        %v1234 = vmul.f32 %v1233, %v1211
        %v1235 = vmul.f32 %v1233, %v1212
        %1238 = vrot.lane.b32.xlu0 %v1234, 126
        %v1239 = vpop.permute.xlu0 %1238
        %1240 = vrot.lane.b32.xlu0 %v1235, 126
        %v1241 = vpop.permute.xlu0 %1240
        %v1244 = vadd.f32 %v1230, %v1239
        %v1245 = vadd.f32 %v1231, %v1241
        %s1246 = scalar_lea.vmem %s253, 80 [#allocation10]
        %1247 = vst.msk [vmem:[%s1246] sm:$0xff] %vm586, %v1244
        %1248 = vst.msk [vmem:[%s1246 + $0x8] sm:$0xff] %vm586, %v1245
        %v1249 = vld [vmem:[#allocation2] sm:$0xff]
        %v1250 = vld [vmem:[#allocation2 + $0x8] sm:$0xff]
        %v1251 = vld [vmem:[#allocation2 + $0x10] sm:$0x3]
        %s1252 = sld [smem:[#allocation7 + $0x6]]
        %v1253 = vstv %s1252
        %v1254 = vmul.f32 %v1249, %v1253
        %v1255 = vmul.f32 %v1250, %v1253
        %v1256 = vmul.f32 %v1251, %v1253
        %v1257 = vadd.f32 %v1254, 1.0
        %v1258 = vadd.f32 %v1255, 1.0
        %v1259 = vadd.f32 %v1256, 1.0
        %v1260 = vrcp.pop %v1257
        %v1261 = vrcp.pop %v1258
        %v1262 = vrcp.pop %v1259
        %v1263 = vmul.f32 %v1260, %v1260
        %v1264 = vmul.f32 %v1261, %v1261
        %v1265 = vmul.f32 %v1262, %v1262
        %v1266 = vmul.f32 %v1254, %v1263
        %v1267 = vmul.f32 %v1255, %v1264
        %v1268 = vmul.f32 %v1256, %v1265
        %1269 = vst.msk [vmem:[#allocation3] sm:$0xff] %vm452, %v1266
        %1270 = vst.msk [vmem:[#allocation3 + $0x8] sm:$0xff] %vm452, %v1267
        %1271 = vst.msk [vmem:[#allocation3 + $0x10] sm:$0x3] %vm455, %v1268
        %s1272 = sld [smem:[#allocation9]]
        %v1273 = vld [vmem:[#allocation3] sm:$0xff]
        %v1274 = vld [vmem:[#allocation3 + $0x8] sm:$0xff]
        %v1275 = vstv %s1272
        %v1276 = vmul.f32 %v1275, %v1273
        %v1277 = vmul.f32 %v1275, %v1274
        %s1278 = sld [smem:[#allocation9 + $0x1]]
        %v1279 = vstv %s1278
        %v1280 = vmul.f32 %v1279, %v1273
        %v1281 = vmul.f32 %v1279, %v1274
        %1284 = vrot.lane.b32.xlu0 %v1280, 127
        %v1285 = vpop.permute.xlu0 %1284
        %1286 = vrot.lane.b32.xlu0 %v1281, 127
        %v1287 = vpop.permute.xlu0 %1286
        %v1290 = vadd.f32 %v1276, %v1285
        %v1291 = vadd.f32 %v1277, %v1287
        %s1292 = sld [smem:[#allocation9 + $0x2]]
        %v1293 = vstv %s1292
        %v1294 = vmul.f32 %v1293, %v1273
        %v1295 = vmul.f32 %v1293, %v1274
        %1298 = vrot.lane.b32.xlu0 %v1294, 126
        %v1299 = vpop.permute.xlu0 %1298
        %1300 = vrot.lane.b32.xlu0 %v1295, 126
        %v1301 = vpop.permute.xlu0 %1300
        %v1304 = vadd.f32 %v1290, %v1299
        %v1305 = vadd.f32 %v1291, %v1301
        %s1306 = sld [smem:[#allocation9 + $0x3]]
        %v1307 = vld [vmem:[#allocation3 + $0x1] sm:$0xff]
        %v1308 = vld [vmem:[#allocation3 + $0x9] sm:$0xff]
        %v1309 = vstv %s1306
        %v1310 = vmul.f32 %v1309, %v1307
        %v1311 = vmul.f32 %v1309, %v1308
        %v1312 = vadd.f32 %v1304, %v1310
        %v1313 = vadd.f32 %v1305, %v1311
        %s1314 = sld [smem:[#allocation9 + $0x4]]
        %v1315 = vstv %s1314
        %v1316 = vmul.f32 %v1315, %v1307
        %v1317 = vmul.f32 %v1315, %v1308
        %1320 = vrot.lane.b32.xlu0 %v1316, 127
        %v1321 = vpop.permute.xlu0 %1320
        %1322 = vrot.lane.b32.xlu0 %v1317, 127
        %v1323 = vpop.permute.xlu0 %1322
        %v1326 = vadd.f32 %v1312, %v1321
        %v1327 = vadd.f32 %v1313, %v1323
        %s1328 = sld [smem:[#allocation9 + $0x5]]
        %v1329 = vstv %s1328
        %v1330 = vmul.f32 %v1329, %v1307
        %v1331 = vmul.f32 %v1329, %v1308
        %1334 = vrot.lane.b32.xlu0 %v1330, 126
        %v1335 = vpop.permute.xlu0 %1334
        %1336 = vrot.lane.b32.xlu0 %v1331, 126
        %v1337 = vpop.permute.xlu0 %1336
        %v1340 = vadd.f32 %v1326, %v1335
        %v1341 = vadd.f32 %v1327, %v1337
        %s1342 = sld [smem:[#allocation9 + $0x6]]
        %v1343 = vld [vmem:[#allocation3 + $0x2] sm:$0xff]
        %v1344 = vld [vmem:[#allocation3 + $0xa] sm:$0xff]
        %v1345 = vstv %s1342
        %v1346 = vmul.f32 %v1345, %v1343
        %v1347 = vmul.f32 %v1345, %v1344
        %v1348 = vadd.f32 %v1340, %v1346
        %v1349 = vadd.f32 %v1341, %v1347
        %s1350 = sld [smem:[#allocation9 + $0x7]]
        %v1351 = vstv %s1350
        %v1352 = vmul.f32 %v1351, %v1343
        %v1353 = vmul.f32 %v1351, %v1344
        %1356 = vrot.lane.b32.xlu0 %v1352, 127
        %v1357 = vpop.permute.xlu0 %1356
        %1358 = vrot.lane.b32.xlu0 %v1353, 127
        %v1359 = vpop.permute.xlu0 %1358
        %v1362 = vadd.f32 %v1348, %v1357
        %v1363 = vadd.f32 %v1349, %v1359
        %s1364 = sld [smem:[#allocation9 + $0x8]]
        %v1365 = vstv %s1364
        %v1366 = vmul.f32 %v1365, %v1343
        %v1367 = vmul.f32 %v1365, %v1344
        %1370 = vrot.lane.b32.xlu0 %v1366, 126
        %v1371 = vpop.permute.xlu0 %1370
        %1372 = vrot.lane.b32.xlu0 %v1367, 126
        %v1373 = vpop.permute.xlu0 %1372
        %v1376 = vadd.f32 %v1362, %v1371
        %v1377 = vadd.f32 %v1363, %v1373
        %s1378 = scalar_lea.vmem %s253, 96 [#allocation10]
        %1379 = vst.msk [vmem:[%s1378] sm:$0xff] %vm586, %v1376
        %1380 = vst.msk [vmem:[%s1378 + $0x8] sm:$0xff] %vm586, %v1377
        %v1381 = vld [vmem:[#allocation2] sm:$0xff]
        %v1382 = vld [vmem:[#allocation2 + $0x8] sm:$0xff]
        %v1383 = vld [vmem:[#allocation2 + $0x10] sm:$0x3]
        %s1384 = sld [smem:[#allocation7 + $0x7]]
        %v1385 = vstv %s1384
        %v1386 = vmul.f32 %v1381, %v1385
        %v1387 = vmul.f32 %v1382, %v1385
        %v1388 = vmul.f32 %v1383, %v1385
        %v1389 = vadd.f32 %v1386, 1.0
        %v1390 = vadd.f32 %v1387, 1.0
        %v1391 = vadd.f32 %v1388, 1.0
        %v1392 = vrcp.pop %v1389
        %v1393 = vrcp.pop %v1390
        %v1394 = vrcp.pop %v1391
        %v1395 = vmul.f32 %v1392, %v1392
        %v1396 = vmul.f32 %v1393, %v1393
        %v1397 = vmul.f32 %v1394, %v1394
        %v1398 = vmul.f32 %v1386, %v1395
        %v1399 = vmul.f32 %v1387, %v1396
        %v1400 = vmul.f32 %v1388, %v1397
        %1401 = vst.msk [vmem:[#allocation3] sm:$0xff] %vm452, %v1398
        %1402 = vst.msk [vmem:[#allocation3 + $0x8] sm:$0xff] %vm452, %v1399
        %1403 = vst.msk [vmem:[#allocation3 + $0x10] sm:$0x3] %vm455, %v1400
        %s1404 = sld [smem:[#allocation9]]
        %v1405 = vld [vmem:[#allocation3] sm:$0xff]
        %v1406 = vld [vmem:[#allocation3 + $0x8] sm:$0xff]
        %v1407 = vstv %s1404
        %v1408 = vmul.f32 %v1407, %v1405
        %v1409 = vmul.f32 %v1407, %v1406
        %s1410 = sld [smem:[#allocation9 + $0x1]]
        %v1411 = vstv %s1410
        %v1412 = vmul.f32 %v1411, %v1405
        %v1413 = vmul.f32 %v1411, %v1406
        %1416 = vrot.lane.b32.xlu0 %v1412, 127
        %v1417 = vpop.permute.xlu0 %1416
        %1418 = vrot.lane.b32.xlu0 %v1413, 127
        %v1419 = vpop.permute.xlu0 %1418
        %v1422 = vadd.f32 %v1408, %v1417
        %v1423 = vadd.f32 %v1409, %v1419
        %s1424 = sld [smem:[#allocation9 + $0x2]]
        %v1425 = vstv %s1424
        %v1426 = vmul.f32 %v1425, %v1405
        %v1427 = vmul.f32 %v1425, %v1406
        %1430 = vrot.lane.b32.xlu0 %v1426, 126
        %v1431 = vpop.permute.xlu0 %1430
        %1432 = vrot.lane.b32.xlu0 %v1427, 126
        %v1433 = vpop.permute.xlu0 %1432
        %v1436 = vadd.f32 %v1422, %v1431
        %v1437 = vadd.f32 %v1423, %v1433
        %s1438 = sld [smem:[#allocation9 + $0x3]]
        %v1439 = vld [vmem:[#allocation3 + $0x1] sm:$0xff]
        %v1440 = vld [vmem:[#allocation3 + $0x9] sm:$0xff]
        %v1441 = vstv %s1438
        %v1442 = vmul.f32 %v1441, %v1439
        %v1443 = vmul.f32 %v1441, %v1440
        %v1444 = vadd.f32 %v1436, %v1442
        %v1445 = vadd.f32 %v1437, %v1443
        %s1446 = sld [smem:[#allocation9 + $0x4]]
        %v1447 = vstv %s1446
        %v1448 = vmul.f32 %v1447, %v1439
        %v1449 = vmul.f32 %v1447, %v1440
        %1452 = vrot.lane.b32.xlu0 %v1448, 127
        %v1453 = vpop.permute.xlu0 %1452
        %1454 = vrot.lane.b32.xlu0 %v1449, 127
        %v1455 = vpop.permute.xlu0 %1454
        %v1458 = vadd.f32 %v1444, %v1453
        %v1459 = vadd.f32 %v1445, %v1455
        %s1460 = sld [smem:[#allocation9 + $0x5]]
        %v1461 = vstv %s1460
        %v1462 = vmul.f32 %v1461, %v1439
        %v1463 = vmul.f32 %v1461, %v1440
        %1466 = vrot.lane.b32.xlu0 %v1462, 126
        %v1467 = vpop.permute.xlu0 %1466
        %1468 = vrot.lane.b32.xlu0 %v1463, 126
        %v1469 = vpop.permute.xlu0 %1468
        %v1472 = vadd.f32 %v1458, %v1467
        %v1473 = vadd.f32 %v1459, %v1469
        %s1474 = sld [smem:[#allocation9 + $0x6]]
        %v1475 = vld [vmem:[#allocation3 + $0x2] sm:$0xff]
        %v1476 = vld [vmem:[#allocation3 + $0xa] sm:$0xff]
        %v1477 = vstv %s1474
        %v1478 = vmul.f32 %v1477, %v1475
        %v1479 = vmul.f32 %v1477, %v1476
        %v1480 = vadd.f32 %v1472, %v1478
        %v1481 = vadd.f32 %v1473, %v1479
        %s1482 = sld [smem:[#allocation9 + $0x7]]
        %v1483 = vstv %s1482
        %v1484 = vmul.f32 %v1483, %v1475
        %v1485 = vmul.f32 %v1483, %v1476
        %1488 = vrot.lane.b32.xlu0 %v1484, 127
        %v1489 = vpop.permute.xlu0 %1488
        %1490 = vrot.lane.b32.xlu0 %v1485, 127
        %v1491 = vpop.permute.xlu0 %1490
        %v1494 = vadd.f32 %v1480, %v1489
        %v1495 = vadd.f32 %v1481, %v1491
        %s1496 = sld [smem:[#allocation9 + $0x8]]
        %v1497 = vstv %s1496
        %v1498 = vmul.f32 %v1497, %v1475
        %v1499 = vmul.f32 %v1497, %v1476
        %1502 = vrot.lane.b32.xlu0 %v1498, 126
        %v1503 = vpop.permute.xlu0 %1502
        %1504 = vrot.lane.b32.xlu0 %v1499, 126
        %v1505 = vpop.permute.xlu0 %1504
        %v1508 = vadd.f32 %v1494, %v1503
        %v1509 = vadd.f32 %v1495, %v1505
        %s1510 = scalar_lea.vmem %s253, 112 [#allocation10]
        %1511 = vst.msk [vmem:[%s1510] sm:$0xff] %vm586, %v1508
        %1512 = vst.msk [vmem:[%s1510 + $0x8] sm:$0xff] %vm586, %v1509
        %v1513 = vld [vmem:[#allocation2] sm:$0xff]
        %v1514 = vld [vmem:[#allocation2 + $0x8] sm:$0xff]
        %v1515 = vld [vmem:[#allocation2 + $0x10] sm:$0x3]
        %s1516 = sld [smem:[#allocation7 + $0x8]]
        %v1517 = vstv %s1516
        %v1518 = vmul.f32 %v1513, %v1517
        %v1519 = vmul.f32 %v1514, %v1517
        %v1520 = vmul.f32 %v1515, %v1517
        %v1521 = vadd.f32 %v1518, 1.0
        %v1522 = vadd.f32 %v1519, 1.0
        %v1523 = vadd.f32 %v1520, 1.0
        %v1524 = vrcp.pop %v1521
        %v1525 = vrcp.pop %v1522
        %v1526 = vrcp.pop %v1523
        %v1527 = vmul.f32 %v1524, %v1524
        %v1528 = vmul.f32 %v1525, %v1525
        %v1529 = vmul.f32 %v1526, %v1526
        %v1530 = vmul.f32 %v1518, %v1527
        %v1531 = vmul.f32 %v1519, %v1528
        %v1532 = vmul.f32 %v1520, %v1529
        %1533 = vst.msk [vmem:[#allocation3] sm:$0xff] %vm452, %v1530
        %1534 = vst.msk [vmem:[#allocation3 + $0x8] sm:$0xff] %vm452, %v1531
        %1535 = vst.msk [vmem:[#allocation3 + $0x10] sm:$0x3] %vm455, %v1532
        %s1536 = sld [smem:[#allocation9]]
        %v1537 = vld [vmem:[#allocation3] sm:$0xff]
        %v1538 = vld [vmem:[#allocation3 + $0x8] sm:$0xff]
        %v1539 = vstv %s1536
        %v1540 = vmul.f32 %v1539, %v1537
        %v1541 = vmul.f32 %v1539, %v1538
        %s1542 = sld [smem:[#allocation9 + $0x1]]
        %v1543 = vstv %s1542
        %v1544 = vmul.f32 %v1543, %v1537
        %v1545 = vmul.f32 %v1543, %v1538
        %1548 = vrot.lane.b32.xlu0 %v1544, 127
        %v1549 = vpop.permute.xlu0 %1548
        %1550 = vrot.lane.b32.xlu0 %v1545, 127
        %v1551 = vpop.permute.xlu0 %1550
        %v1554 = vadd.f32 %v1540, %v1549
        %v1555 = vadd.f32 %v1541, %v1551
        %s1556 = sld [smem:[#allocation9 + $0x2]]
        %v1557 = vstv %s1556
        %v1558 = vmul.f32 %v1557, %v1537
        %v1559 = vmul.f32 %v1557, %v1538
        %1562 = vrot.lane.b32.xlu0 %v1558, 126
        %v1563 = vpop.permute.xlu0 %1562
        %1564 = vrot.lane.b32.xlu0 %v1559, 126
        %v1565 = vpop.permute.xlu0 %1564
        %v1568 = vadd.f32 %v1554, %v1563
        %v1569 = vadd.f32 %v1555, %v1565
        %s1570 = sld [smem:[#allocation9 + $0x3]]
        %v1571 = vld [vmem:[#allocation3 + $0x1] sm:$0xff]
        %v1572 = vld [vmem:[#allocation3 + $0x9] sm:$0xff]
        %v1573 = vstv %s1570
        %v1574 = vmul.f32 %v1573, %v1571
        %v1575 = vmul.f32 %v1573, %v1572
        %v1576 = vadd.f32 %v1568, %v1574
        %v1577 = vadd.f32 %v1569, %v1575
        %s1578 = sld [smem:[#allocation9 + $0x4]]
        %v1579 = vstv %s1578
        %v1580 = vmul.f32 %v1579, %v1571
        %v1581 = vmul.f32 %v1579, %v1572
        %1584 = vrot.lane.b32.xlu0 %v1580, 127
        %v1585 = vpop.permute.xlu0 %1584
        %1586 = vrot.lane.b32.xlu0 %v1581, 127
        %v1587 = vpop.permute.xlu0 %1586
        %v1590 = vadd.f32 %v1576, %v1585
        %v1591 = vadd.f32 %v1577, %v1587
        %s1592 = sld [smem:[#allocation9 + $0x5]]
        %v1593 = vstv %s1592
        %v1594 = vmul.f32 %v1593, %v1571
        %v1595 = vmul.f32 %v1593, %v1572
        %1598 = vrot.lane.b32.xlu0 %v1594, 126
        %v1599 = vpop.permute.xlu0 %1598
        %1600 = vrot.lane.b32.xlu0 %v1595, 126
        %v1601 = vpop.permute.xlu0 %1600
        %v1604 = vadd.f32 %v1590, %v1599
        %v1605 = vadd.f32 %v1591, %v1601
        %s1606 = sld [smem:[#allocation9 + $0x6]]
        %v1607 = vld [vmem:[#allocation3 + $0x2] sm:$0xff]
        %v1608 = vld [vmem:[#allocation3 + $0xa] sm:$0xff]
        %v1609 = vstv %s1606
        %v1610 = vmul.f32 %v1609, %v1607
        %v1611 = vmul.f32 %v1609, %v1608
        %v1612 = vadd.f32 %v1604, %v1610
        %v1613 = vadd.f32 %v1605, %v1611
        %s1614 = sld [smem:[#allocation9 + $0x7]]
        %v1615 = vstv %s1614
        %v1616 = vmul.f32 %v1615, %v1607
        %v1617 = vmul.f32 %v1615, %v1608
        %1620 = vrot.lane.b32.xlu0 %v1616, 127
        %v1621 = vpop.permute.xlu0 %1620
        %1622 = vrot.lane.b32.xlu0 %v1617, 127
        %v1623 = vpop.permute.xlu0 %1622
        %v1626 = vadd.f32 %v1612, %v1621
        %v1627 = vadd.f32 %v1613, %v1623
        %s1628 = sld [smem:[#allocation9 + $0x8]]
        %v1629 = vstv %s1628
        %v1630 = vmul.f32 %v1629, %v1607
        %v1631 = vmul.f32 %v1629, %v1608
        %1634 = vrot.lane.b32.xlu0 %v1630, 126
        %v1635 = vpop.permute.xlu0 %1634
        %1636 = vrot.lane.b32.xlu0 %v1631, 126
        %v1637 = vpop.permute.xlu0 %1636
        %v1640 = vadd.f32 %v1626, %v1635
        %v1641 = vadd.f32 %v1627, %v1637
        %s1642 = scalar_lea.vmem %s253, 128 [#allocation10]
        %1643 = vst.msk [vmem:[%s1642] sm:$0xff] %vm586, %v1640
        %1644 = vst.msk [vmem:[%s1642 + $0x8] sm:$0xff] %vm586, %v1641
        %v1645 = vld [vmem:[#allocation2] sm:$0xff]
        %v1646 = vld [vmem:[#allocation2 + $0x8] sm:$0xff]
        %v1647 = vld [vmem:[#allocation2 + $0x10] sm:$0x3]
        %s1648 = sld [smem:[#allocation7 + $0x9]]
        %v1649 = vstv %s1648
        %v1650 = vmul.f32 %v1645, %v1649
        %v1651 = vmul.f32 %v1646, %v1649
        %v1652 = vmul.f32 %v1647, %v1649
        %v1653 = vadd.f32 %v1650, 1.0
        %v1654 = vadd.f32 %v1651, 1.0
        %v1655 = vadd.f32 %v1652, 1.0
        %v1656 = vrcp.pop %v1653
        %v1657 = vrcp.pop %v1654
        %v1658 = vrcp.pop %v1655
        %v1659 = vmul.f32 %v1656, %v1656
        %v1660 = vmul.f32 %v1657, %v1657
        %v1661 = vmul.f32 %v1658, %v1658
        %v1662 = vmul.f32 %v1650, %v1659
        %v1663 = vmul.f32 %v1651, %v1660
        %v1664 = vmul.f32 %v1652, %v1661
        %1665 = vst.msk [vmem:[#allocation3] sm:$0xff] %vm452, %v1662
        %1666 = vst.msk [vmem:[#allocation3 + $0x8] sm:$0xff] %vm452, %v1663
        %1667 = vst.msk [vmem:[#allocation3 + $0x10] sm:$0x3] %vm455, %v1664
        %s1668 = sld [smem:[#allocation9]]
        %v1669 = vld [vmem:[#allocation3] sm:$0xff]
        %v1670 = vld [vmem:[#allocation3 + $0x8] sm:$0xff]
        %v1671 = vstv %s1668
        %v1672 = vmul.f32 %v1671, %v1669
        %v1673 = vmul.f32 %v1671, %v1670
        %s1674 = sld [smem:[#allocation9 + $0x1]]
        %v1675 = vstv %s1674
        %v1676 = vmul.f32 %v1675, %v1669
        %v1677 = vmul.f32 %v1675, %v1670
        %1680 = vrot.lane.b32.xlu0 %v1676, 127
        %v1681 = vpop.permute.xlu0 %1680
        %1682 = vrot.lane.b32.xlu0 %v1677, 127
        %v1683 = vpop.permute.xlu0 %1682
        %v1686 = vadd.f32 %v1672, %v1681
        %v1687 = vadd.f32 %v1673, %v1683
        %s1688 = sld [smem:[#allocation9 + $0x2]]
        %v1689 = vstv %s1688
        %v1690 = vmul.f32 %v1689, %v1669
        %v1691 = vmul.f32 %v1689, %v1670
        %1694 = vrot.lane.b32.xlu0 %v1690, 126
        %v1695 = vpop.permute.xlu0 %1694
        %1696 = vrot.lane.b32.xlu0 %v1691, 126
        %v1697 = vpop.permute.xlu0 %1696
        %v1700 = vadd.f32 %v1686, %v1695
        %v1701 = vadd.f32 %v1687, %v1697
        %s1702 = sld [smem:[#allocation9 + $0x3]]
        %v1703 = vld [vmem:[#allocation3 + $0x1] sm:$0xff]
        %v1704 = vld [vmem:[#allocation3 + $0x9] sm:$0xff]
        %v1705 = vstv %s1702
        %v1706 = vmul.f32 %v1705, %v1703
        %v1707 = vmul.f32 %v1705, %v1704
        %v1708 = vadd.f32 %v1700, %v1706
        %v1709 = vadd.f32 %v1701, %v1707
        %s1710 = sld [smem:[#allocation9 + $0x4]]
        %v1711 = vstv %s1710
        %v1712 = vmul.f32 %v1711, %v1703
        %v1713 = vmul.f32 %v1711, %v1704
        %1716 = vrot.lane.b32.xlu0 %v1712, 127
        %v1717 = vpop.permute.xlu0 %1716
        %1718 = vrot.lane.b32.xlu0 %v1713, 127
        %v1719 = vpop.permute.xlu0 %1718
        %v1722 = vadd.f32 %v1708, %v1717
        %v1723 = vadd.f32 %v1709, %v1719
        %s1724 = sld [smem:[#allocation9 + $0x5]]
        %v1725 = vstv %s1724
        %v1726 = vmul.f32 %v1725, %v1703
        %v1727 = vmul.f32 %v1725, %v1704
        %1730 = vrot.lane.b32.xlu0 %v1726, 126
        %v1731 = vpop.permute.xlu0 %1730
        %1732 = vrot.lane.b32.xlu0 %v1727, 126
        %v1733 = vpop.permute.xlu0 %1732
        %v1736 = vadd.f32 %v1722, %v1731
        %v1737 = vadd.f32 %v1723, %v1733
        %s1738 = sld [smem:[#allocation9 + $0x6]]
        %v1739 = vld [vmem:[#allocation3 + $0x2] sm:$0xff]
        %v1740 = vld [vmem:[#allocation3 + $0xa] sm:$0xff]
        %v1741 = vstv %s1738
        %v1742 = vmul.f32 %v1741, %v1739
        %v1743 = vmul.f32 %v1741, %v1740
        %v1744 = vadd.f32 %v1736, %v1742
        %v1745 = vadd.f32 %v1737, %v1743
        %s1746 = sld [smem:[#allocation9 + $0x7]]
        %v1747 = vstv %s1746
        %v1748 = vmul.f32 %v1747, %v1739
        %v1749 = vmul.f32 %v1747, %v1740
        %1752 = vrot.lane.b32.xlu0 %v1748, 127
        %v1753 = vpop.permute.xlu0 %1752
        %1754 = vrot.lane.b32.xlu0 %v1749, 127
        %v1755 = vpop.permute.xlu0 %1754
        %v1758 = vadd.f32 %v1744, %v1753
        %v1759 = vadd.f32 %v1745, %v1755
        %s1760 = sld [smem:[#allocation9 + $0x8]]
        %v1761 = vstv %s1760
        %v1762 = vmul.f32 %v1761, %v1739
        %v1763 = vmul.f32 %v1761, %v1740
        %1766 = vrot.lane.b32.xlu0 %v1762, 126
        %v1767 = vpop.permute.xlu0 %1766
        %1768 = vrot.lane.b32.xlu0 %v1763, 126
        %v1769 = vpop.permute.xlu0 %1768
        %v1772 = vadd.f32 %v1758, %v1767
        %v1773 = vadd.f32 %v1759, %v1769
        %s1774 = scalar_lea.vmem %s253, 144 [#allocation10]
        %1775 = vst.msk [vmem:[%s1774] sm:$0xff] %vm586, %v1772
        %1776 = vst.msk [vmem:[%s1774 + $0x8] sm:$0xff] %vm586, %v1773
        %s1777 = sand.u32 %s133, 1
        %s1778 = scalar_lea.sflag [#allocation5], %s1777
        %s1779 = sand.u32 %s133, 1
        %s1780 = smul.addr %s1779, 160
        %s1781 = scalar_lea.vmem [#allocation10], %s1780
        // Predicated region
        $region49: #{hist_forward.1} parent=35 // pred_check
          %p1782 = pneg %p143
        $region50: #{hist_forward.1} parent=35 // pred_check_branch
          %1784 = sbr.rel (%p1782) target = $region52
        $region51: #{hist_forward.1} parent=35 // pred_region
          %s1785 = smul.u32 2, %s25
          %s1787 = ssub.s32 2560, 2560
          %1788 = vsyncadd %s1778, %s1787
          %s1789 = smul.addr %s24, 20
          %s1790 = sadd.s32 %s1785, %s1789
          %s1791 = smul.addr %s1790, 128
          %s1792 = scalar_lea.hbm %s4, %s1791
          %s1793 = sshll.u32 %s1781, 4
          %s1794 = int_to_ptr.vmem [resolvable:$true] %s1793
          %1799 = dma.vmem_to_hbm [thread:$0]  %s1794, 2560, %s1792, %s1778, 128, 128, 8
        $region52: #{hist_forward.1} parent=35 // pred_fallthru
          _
      $region36: #{hist_forward.1} parent=5 // pred_fallthru
        _
      %p1800 = scmp.le.s32.totalorder 2, %s15
      // Predicated region
      $region53: #{hist_forward.1} parent=5 // pred_check
        %p1801 = pneg %p1800
      $region54: #{hist_forward.1} parent=5 // pred_check_branch
        %1803 = sbr.rel (%p1801) target = $region56
      $region55: #{hist_forward.1} parent=5 // pred_region
        %s1804 = ssub.s32 %s15, 2
        // Predicated region
        $region57: #{hist_forward.1} parent=55 // pred_check
          %p1805 = pneg %p149
        $region58: #{hist_forward.1} parent=55 // pred_check_branch
          %1807 = sbr.rel (%p1805) target = $region60
        $region59: #{hist_forward.1} parent=55 // pred_region
          %s1808 = sand.u32 %s134, 1
          %s1809 = scalar_lea.sflag [#allocation5], %s1808
          %s1810 = sand.u32 %s134, 1
          %s1811 = smul.addr %s1810, 160
          %s1812 = scalar_lea.vmem [#allocation10], %s1811
          %1813 = dma.done %s1809, 2560
        $region60: #{hist_forward.1} parent=55 // pred_fallthru
          _
      $region56: #{hist_forward.1} parent=5 // pred_fallthru
        _
    $region6: #{hist_forward.1} parent=1 // loop_footer
      %s19 = sadd.s32 1, %s15
    $region7: #{hist_forward.1} parent=1 // loop_footer_branch
      %14 = sbr.rel target = $region3
    $region8: #{hist_forward.1} parent=1 // loop_exit
      _
    %1814 = vsyncpa [#allocation5], 1
    %s1815 = scalar_lea.sflag [#allocation5], 1
    %1816 = vsyncpa %s1815, 1
    %1817 = vsyncpa [#allocation6], 1
    %s1818 = scalar_lea.sflag [#allocation6], 1
    %1819 = vsyncpa %s1818, 1
    %1820 = vsyncpa [#allocation8], 1

</llo_original>
